<compile_context>
chip_gen: v7x
topology: tpu7x:2x2x1
jax: 0.10.0
libtpu: 0.0.40
codegen_flags: <defaults>
</compile_context>

<pallas_src>
import math
from functools import partial

import jax
import jax.numpy as jnp
from jax.experimental import pallas as pl
from jax.experimental.pallas import tpu as pltpu


def _mha_flash_kernel(*refs, causal, has_mask, f32_exp):
    if has_mask:
        (q_ref, k_ref, v_ref, mask_ref, wq_ref, wk_ref, wv_ref, wo_ref,
         out_ref, q_scr, m_scr, l_scr, acc_scr) = refs
    else:
        (q_ref, k_ref, v_ref, wq_ref, wk_ref, wv_ref, wo_ref,
         out_ref, q_scr, m_scr, l_scr, acc_scr) = refs
        mask_ref = None

    h, d, d_k = wq_ref.shape          # weights pre-reshaped to (h, d, d_head)
    d_v = wv_ref.shape[-1]
    tq = q_ref.shape[1]
    tk = k_ref.shape[1]

    qi = pl.program_id(1)
    kv = pl.program_id(2)

    if causal:
        # Last kv block that intersects the causal region for this q tile.
        last_kv = jnp.minimum((qi * tq + tq - 1) // tk, pl.num_programs(2) - 1)
    else:
        last_kv = pl.num_programs(2) - 1

    def step():
        @pl.when(kv == 0)
        def _init():
            # Project the Q tile once per (batch, q-tile); head-batched matmul emits
            # the (h, tq, d_k) layout straight from the MXU (no split_heads relayout).
            qb = jnp.broadcast_to(q_ref[0][None], (h, tq, d))
            qh = jnp.einsum("hqd,hde->hqe", qb, wq_ref[...],
                            preferred_element_type=jnp.float32)
            q_scr[...] = qh.astype(jnp.bfloat16)
            m_scr[...] = jnp.full(m_scr.shape, -jnp.inf, m_scr.dtype)
            l_scr[...] = jnp.zeros(l_scr.shape, l_scr.dtype)
            acc_scr[...] = jnp.zeros(acc_scr.shape, acc_scr.dtype)

        # Project the current K/V tile (bf16 MXU inputs, f32 accumulation), head-major.
        kb = jnp.broadcast_to(k_ref[0][None], (h, tk, d))
        vb = jnp.broadcast_to(v_ref[0][None], (h, tk, d))
        kh = jnp.einsum("hkd,hde->hke", kb, wk_ref[...],
                        preferred_element_type=jnp.float32).astype(jnp.bfloat16)
        vh = jnp.einsum("hkd,hde->hke", vb, wv_ref[...],
                        preferred_element_type=jnp.float32).astype(jnp.bfloat16)

        # Head-batched scores (h, tq, tk); the 1/sqrt(d_k) scale is folded into wq.
        s = jnp.einsum("hqe,hke->hqk", q_scr[...], kh,
                       preferred_element_type=jnp.float32)

        if causal:
            # Generate the causal mask on the VPU instead of DMA-ing an int8 tile.
            row = qi * tq + jax.lax.broadcasted_iota(jnp.int32, (1, tq, tk), 1)
            col = kv * tk + jax.lax.broadcasted_iota(jnp.int32, (1, tq, tk), 2)
            s = jnp.where(col > row, -1.0e9, s)
        elif mask_ref is not None:
            s = jnp.where(mask_ref[0][None, :, :] != 0, -1.0e9, s)

        # Online (flash) softmax; statistics in f32.
        m_prev = m_scr[...]                                         # (h, tq, 1)
        m_new = jnp.maximum(m_prev, jnp.max(s, axis=-1, keepdims=True))
        alpha = jnp.exp(m_prev - m_new)
        if f32_exp:
            p = jnp.exp(s - m_new)
            l_scr[...] = alpha * l_scr[...] + jnp.sum(p, axis=-1, keepdims=True)
            p_mm = p.astype(jnp.bfloat16)
        else:
            # bf16 EUP (v6e/v7x): exp in bf16, denominator still accumulated in f32.
            p_mm = jnp.exp((s - m_new).astype(jnp.bfloat16))
            l_scr[...] = alpha * l_scr[...] + jnp.sum(p_mm, axis=-1, keepdims=True,
                                                      dtype=jnp.float32)
        acc_scr[...] = alpha * acc_scr[...] + jnp.einsum(
            "hqk,hke->hqe", p_mm, vh, preferred_element_type=jnp.float32)
        m_scr[...] = m_new

        @pl.when(kv == last_kv)
        def _finalize():
            # Normalize with an EUP reciprocal; combine_heads + out_proj fused into a
            # head-batched matmul followed by a head-sum (no concatenate, no transpose).
            ctx = acc_scr[...] * pl.reciprocal(l_scr[...], approx=True)   # (h, tq, d_v)
            per_head = jnp.einsum("hqv,hvd->hqd", ctx.astype(jnp.bfloat16), wo_ref[...],
                                  preferred_element_type=jnp.float32)     # (h, tq, d)
            out_ref[0] = jnp.sum(per_head, axis=0).astype(out_ref.dtype)

    if causal:
        @pl.when(kv <= last_kv)     # skip fully-masked kv tiles entirely
        def _active():
            step()
    else:
        step()


def _choose_tile(L, cap):
    """Full length if it fits under the cap; otherwise the largest multiple-of-8
    candidate <= cap that divides L exactly."""
    if L <= cap:
        return L
    for t in (512, 256, 128, 64, 32, 16, 8):
        if t <= cap and L % t == 0:
            return t
    raise ValueError(f"cannot tile sequence length {L} (must be divisible by 8)")


def _has_bf16_eup():
    # bf16 exponentials only pay off on v6e / v7x (v5e and older have no bf16 EUP).
    try:
        kind = jax.devices()[0].device_kind.lower()
    except Exception:
        return False
    return ("v6" in kind) or ("v7" in kind) or ("tpu7" in kind)


class MultiHeadAttentionPallas:
    """Pallas port of the PyTorch MultiHeadAttention module (bias-free Linears)."""

    def __init__(self, h, d, d_k, d_v, p_dropout=0.0, *, key):
        self.h, self.d, self.d_k, self.d_v = h, d, d_k, d_v
        self.p_dropout = p_dropout  # dropout never applied in the reference forward
        k0, k1, k2, k3 = jax.random.split(key, 4)
        # PyTorch nn.Linear weight layout: (out_features, in_features), f32 masters.
        self.wq = jax.random.normal(k0, (h * d_k, d), jnp.float32) * 0.1
        self.wk = jax.random.normal(k1, (h * d_k, d), jnp.float32) * 0.1
        self.wv = jax.random.normal(k2, (h * d_v, d), jnp.float32) * 0.1
        self.wo = jax.random.normal(k3, (d, h * d_v), jnp.float32) * 0.1

    def __call__(self, Q_in, K_in=None, V_in=None, mask=None, *,
                 is_causal=False, q_tile=256, kv_tile=512):
        if K_in is None:
            K_in = Q_in
        if V_in is None:
            V_in = Q_in
        if mask is not None and is_causal:
            raise ValueError("pass either an explicit mask or is_causal=True, not both")

        B, Lq, d = Q_in.shape
        _, Lk, _ = K_in.shape
        h, d_k, d_v = self.h, self.d_k, self.d_v
        assert d == self.d

        tq = _choose_tile(Lq, q_tile)
        tk = _choose_tile(Lk, kv_tile)
        grid = (B, Lq // tq, Lk // tk)

        has_mask = mask is not None
        if has_mask:
            # Torch broadcast rules: 2-D mask == key-padding mask -> unsqueeze(1).unsqueeze(2).
            m = mask.astype(bool)
            if m.ndim == 2:
                m = m[:, None, :]
            mask_b = jnp.broadcast_to(m, (B, Lq, Lk)).astype(jnp.int8)

        # bf16 matmul operands; 1/sqrt(d_k) folded into the Q projection; weights are
        # pre-reshaped to (h, d, d_head) so in-kernel projections emit head-major layout.
        scale = 1.0 / math.sqrt(d_k)
        wq_r = (self.wq.T * scale).reshape(d, h, d_k).transpose(1, 0, 2).astype(jnp.bfloat16)
        wk_r = self.wk.T.reshape(d, h, d_k).transpose(1, 0, 2).astype(jnp.bfloat16)
        wv_r = self.wv.T.reshape(d, h, d_v).transpose(1, 0, 2).astype(jnp.bfloat16)
        wo_r = self.wo.T.reshape(h, d_v, d).astype(jnp.bfloat16)

        q_bf = Q_in.astype(jnp.bfloat16)
        k_bf = K_in.astype(jnp.bfloat16)
        v_bf = V_in.astype(jnp.bfloat16)

        if is_causal:
            # Clamp the kv block index so fully-masked kv tiles reuse the previous block
            # (no new DMA issued); their compute is skipped in the kernel with pl.when.
            def kv_index(b, qi, ki):
                last = (qi * tq + tq - 1) // tk
                return (b, jnp.minimum(ki, last), 0)
        else:
            def kv_index(b, qi, ki):
                return (b, ki, 0)

        in_specs = [
            pl.BlockSpec((1, tq, d), lambda b, qi, ki: (b, qi, 0)),
            pl.BlockSpec((1, tk, d), kv_index),
            pl.BlockSpec((1, tk, d), kv_index),
        ]
        inputs = [q_bf, k_bf, v_bf]
        if has_mask:
            in_specs.append(pl.BlockSpec((1, tq, tk), lambda b, qi, ki: (b, qi, ki)))
            inputs.append(mask_b)
        in_specs += [
            pl.BlockSpec((h, d, d_k), lambda b, qi, ki: (0, 0, 0)),
            pl.BlockSpec((h, d, d_k), lambda b, qi, ki: (0, 0, 0)),
            pl.BlockSpec((h, d, d_v), lambda b, qi, ki: (0, 0, 0)),
            pl.BlockSpec((h, d_v, d), lambda b, qi, ki: (0, 0, 0)),
        ]
        inputs += [wq_r, wk_r, wv_r, wo_r]

        kernel = partial(_mha_flash_kernel, causal=is_causal, has_mask=has_mask,
                         f32_exp=not _has_bf16_eup())

        return pl.pallas_call(
            kernel,
            out_shape=jax.ShapeDtypeStruct((B, Lq, d), jnp.float32),
            grid_spec=pltpu.PrefetchScalarGridSpec(
                num_scalar_prefetch=0,
                grid=grid,
                in_specs=in_specs,
                out_specs=pl.BlockSpec((1, tq, d), lambda b, qi, ki: (b, qi, 0)),
                scratch_shapes=[
                    pltpu.VMEM((h, tq, d_k), jnp.bfloat16),   # projected Q tile
                    pltpu.VMEM((h, tq, 1), jnp.float32),      # running max
                    pltpu.VMEM((h, tq, 1), jnp.float32),      # running denom
                    pltpu.VMEM((h, tq, d_v), jnp.float32),    # running context
                ],
            ),
            compiler_params=pltpu.CompilerParams(
                dimension_semantics=("parallel", "parallel", "arbitrary"),
                # Worst-case tiles (tq=256, tk=512) need a few MiB of intermediates;
                # 32 MiB leaves headroom everywhere and only half of v7x's 64 MiB VMEM.
                vmem_limit_bytes=32 * 1024 * 1024,
            ),
        )(*inputs)


def _reference_mha(mod, Q_in, K_in=None, V_in=None, mask=None):
    """Plain-JAX f32 replica of the PyTorch forward for validation."""
    if K_in is None:
        K_in = Q_in
    if V_in is None:
        V_in = Q_in
    B, Lq, _ = Q_in.shape
    h, d_k, d_v = mod.h, mod.d_k, mod.d_v
    Q = Q_in @ mod.wq.T
    K = K_in @ mod.wk.T
    V = V_in @ mod.wv.T

    def split(t, dh):
        B_, L_, _ = t.shape
        return t.reshape(B_, L_, h, dh).transpose(0, 2, 1, 3)

    Qh, Kh, Vh = split(Q, d_k), split(K, d_k), split(V, d_v)
    scores = jnp.einsum("bhqd,bhkd->bhqk", Qh, Kh) / math.sqrt(d_k)
    if mask is not None:
        m = mask.astype(bool)
        if m.ndim == 2:
            m = m[:, None, None, :]     # torch: unsqueeze(1).unsqueeze(2)
        elif m.ndim == 3:
            m = m[:, None, :, :]
        scores = jnp.where(m, -1.0e9, scores)
    attn = jax.nn.softmax(scores, axis=-1)
    ctx = jnp.einsum("bhqk,bhkd->bhqd", attn, Vh)
    ctx = ctx.transpose(0, 2, 1, 3).reshape(B, Lq, h * d_v)
    return ctx @ mod.wo.T


if __name__ == "__main__":
    key = jax.random.PRNGKey(0)
    k_w, k_x1, k_x2, k_q3, k_kv3 = jax.random.split(key, 5)

    B, d = 2, 32
    h, d_k, d_v = 4, 8, 8
    mha = MultiHeadAttentionPallas(h=h, d=d, d_k=d_k, d_v=d_v, key=k_w)

    # --- test 1: tiny self-attention, no mask (single full-dim tile) ---
    L1 = 8
    x1 = jax.random.normal(k_x1, (B, L1, d), jnp.float32)
    out1 = jax.block_until_ready(mha(x1))
    ref1 = _reference_mha(mha, x1)
    assert out1.shape == (B, L1, d)
    assert jnp.allclose(out1, ref1, atol=3e-2, rtol=3e-2), "mismatch vs reference (no mask)"

    # --- test 2: causal fast path with multiple kv tiles -> exercises the in-kernel
    #     iota mask, the online softmax across tiles, and causal tile skipping. ---
    L2 = 256
    x2 = jax.random.normal(k_x2, (B, L2, d), jnp.float32)
    out2 = jax.block_until_ready(mha(x2, is_causal=True, q_tile=128, kv_tile=64))
    causal = jnp.triu(jnp.ones((L2, L2), jnp.bool_), k=1)   # True above diag => masked
    ref2 = _reference_mha(mha, x2, mask=jnp.broadcast_to(causal[None], (B, L2, L2)))
    assert out2.shape == (B, L2, d)
    assert jnp.allclose(out2, ref2, atol=3e-2, rtol=3e-2), "mismatch vs reference (causal)"

    # --- test 3: cross-attention with a 2-D key-padding mask (generic int8 mask path) ---
    Lq3, Lk3 = 64, 128
    q3 = jax.random.normal(k_q3, (B, Lq3, d), jnp.float32)
    kv3 = jax.random.normal(k_kv3, (B, Lk3, d), jnp.float32)
    pad = jnp.arange(Lk3)[None, :] >= jnp.array([[100], [80]])   # True => masked key
    out3 = jax.block_until_ready(mha(q3, kv3, kv3, mask=pad))
    ref3 = _reference_mha(mha, q3, kv3, kv3, mask=pad)
    assert out3.shape == (B, Lq3, d)
    assert jnp.allclose(out3, ref3, atol=3e-2, rtol=3e-2), "mismatch vs reference (padding mask)"

    print("KERNEL_OK")
</pallas_src>

<mosaic_0001>
module attributes {stable_mosaic.version = 11 : i64} {
  func.func @_mha_flash_kernel(%arg0: i32, %arg1: i32, %arg2: i32, %arg3: memref<1x8x32xbf16, #tpu.memory_space<vmem>>, %arg4: memref<1x8x32xbf16, #tpu.memory_space<vmem>>, %arg5: memref<1x8x32xbf16, #tpu.memory_space<vmem>>, %arg6: memref<4x32x8xbf16, #tpu.memory_space<vmem>>, %arg7: memref<4x32x8xbf16, #tpu.memory_space<vmem>>, %arg8: memref<4x32x8xbf16, #tpu.memory_space<vmem>>, %arg9: memref<4x8x32xbf16, #tpu.memory_space<vmem>>, %arg10: memref<1x8x32xf32, #tpu.memory_space<vmem>>, %arg11: memref<4x8x8xbf16, #tpu.memory_space<vmem>>, %arg12: memref<4x8x1xf32, #tpu.memory_space<vmem>>, %arg13: memref<4x8x1xf32, #tpu.memory_space<vmem>>, %arg14: memref<4x8x8xf32, #tpu.memory_space<vmem>>) attributes {dimension_semantics = [#tpu.dimension_semantics<parallel>, #tpu.dimension_semantics<parallel>, #tpu.dimension_semantics<arbitrary>], iteration_bounds = array<i64: 2, 1, 1>, scalar_prefetch = 0 : i64, scratch_operands = 4 : i64, tpu.core_type = #tpu.core_type<tc>, window_params = [{transform_indices = @transform_0, window_bounds = array<i64: 1, 8, 32>}, {transform_indices = @transform_1, window_bounds = array<i64: 1, 8, 32>}, {transform_indices = @transform_2, window_bounds = array<i64: 1, 8, 32>}, {pipeline_mode = #tpu.pipeline_mode<synchronous>, transform_indices = @transform_3, window_bounds = array<i64: 4, 32, 8>}, {pipeline_mode = #tpu.pipeline_mode<synchronous>, transform_indices = @transform_4, window_bounds = array<i64: 4, 32, 8>}, {pipeline_mode = #tpu.pipeline_mode<synchronous>, transform_indices = @transform_5, window_bounds = array<i64: 4, 32, 8>}, {pipeline_mode = #tpu.pipeline_mode<synchronous>, transform_indices = @transform_6, window_bounds = array<i64: 4, 8, 32>}, {transform_indices = @transform_7, window_bounds = array<i64: 1, 8, 32>}]} {
    %c0_i32 = arith.constant 0 : i32
    %0 = arith.cmpi eq, %arg2, %c0_i32 : i32
    %1 = arith.extui %0 : i1 to i32
    %c0_i32_0 = arith.constant 0 : i32
    %2 = arith.cmpi ne, %1, %c0_i32_0 : i32
    scf.if %2 {
      %c0_40 = arith.constant 0 : index
      %c0_41 = arith.constant 0 : index
      %c0_42 = arith.constant 0 : index
      %47 = vector.load %arg3[%c0_40, %c0_41, %c0_42] : memref<1x8x32xbf16, #tpu.memory_space<vmem>>, vector<1x8x32xbf16>
      %48 = vector.shape_cast %47 : vector<1x8x32xbf16> to vector<8x32xbf16>
      %49 = vector.shape_cast %48 : vector<8x32xbf16> to vector<1x8x32xbf16>
      %50 = vector.shape_cast %49 : vector<1x8x32xbf16> to vector<1x8x32xbf16>
      %51 = vector.broadcast %50 : vector<1x8x32xbf16> to vector<4x8x32xbf16>
      %c0_43 = arith.constant 0 : index
      %c0_44 = arith.constant 0 : index
      %c0_45 = arith.constant 0 : index
      %52 = vector.load %arg6[%c0_43, %c0_44, %c0_45] : memref<4x32x8xbf16, #tpu.memory_space<vmem>>, vector<4x32x8xbf16>
      "tpu.trace_start"() <{level = 10 : i32, message = "hqd,hde->hqe"}> : () -> ()
      %cst_46 = arith.constant dense<0.000000e+00> : vector<4x8x8xf32>
      %53 = tpu.matmul %51, %52, %cst_46 {dimension_numbers = #tpu.dot_dimension_numbers<[2], [1], [1], [2], [0, 0, 0, 1, 1, 2], [0], [0]>} : vector<4x8x32xbf16>, vector<4x32x8xbf16>, vector<4x8x8xf32> -> vector<4x8x8xf32>
      "tpu.trace_stop"() : () -> ()
      %54 = arith.truncf %53 : vector<4x8x8xf32> to vector<4x8x8xbf16>
      %c0_47 = arith.constant 0 : index
      %c0_48 = arith.constant 0 : index
      %c0_49 = arith.constant 0 : index
      %55 = vector.load %arg11[%c0_47, %c0_48, %c0_49] : memref<4x8x8xbf16, #tpu.memory_space<vmem>>, vector<4x8x8xbf16>
      tpu.vector_store %arg11[%c0_47, %c0_48, %c0_49], %54 {strides = array<i32>} : memref<4x8x8xbf16, #tpu.memory_space<vmem>>, vector<4x8x8xbf16>,
      %cst_50 = arith.constant 0xFF800000 : f32
      %56 = vector.broadcast %cst_50 : f32 to vector<4x8x1xf32>
      %c0_51 = arith.constant 0 : index
      %c0_52 = arith.constant 0 : index
      %c0_53 = arith.constant 0 : index
      %57 = vector.load %arg12[%c0_51, %c0_52, %c0_53] : memref<4x8x1xf32, #tpu.memory_space<vmem>>, vector<4x8x1xf32>
      tpu.vector_store %arg12[%c0_51, %c0_52, %c0_53], %56 {strides = array<i32>} : memref<4x8x1xf32, #tpu.memory_space<vmem>>, vector<4x8x1xf32>,
      %cst_54 = arith.constant 0.000000e+00 : f32
      %58 = vector.broadcast %cst_54 : f32 to vector<4x8x1xf32>
      %c0_55 = arith.constant 0 : index
      %c0_56 = arith.constant 0 : index
      %c0_57 = arith.constant 0 : index
      %59 = vector.load %arg13[%c0_55, %c0_56, %c0_57] : memref<4x8x1xf32, #tpu.memory_space<vmem>>, vector<4x8x1xf32>
      tpu.vector_store %arg13[%c0_55, %c0_56, %c0_57], %58 {strides = array<i32>} : memref<4x8x1xf32, #tpu.memory_space<vmem>>, vector<4x8x1xf32>,
      %cst_58 = arith.constant 0.000000e+00 : f32
      %60 = vector.broadcast %cst_58 : f32 to vector<4x8x8xf32>
      %c0_59 = arith.constant 0 : index
      %c0_60 = arith.constant 0 : index
      %c0_61 = arith.constant 0 : index
      %61 = vector.load %arg14[%c0_59, %c0_60, %c0_61] : memref<4x8x8xf32, #tpu.memory_space<vmem>>, vector<4x8x8xf32>
      tpu.vector_store %arg14[%c0_59, %c0_60, %c0_61], %60 {strides = array<i32>} : memref<4x8x8xf32, #tpu.memory_space<vmem>>, vector<4x8x8xf32>,
    } else {
    }
    %c0 = arith.constant 0 : index
    %c0_1 = arith.constant 0 : index
    %c0_2 = arith.constant 0 : index
    %3 = vector.load %arg4[%c0, %c0_1, %c0_2] : memref<1x8x32xbf16, #tpu.memory_space<vmem>>, vector<1x8x32xbf16>
    %4 = vector.shape_cast %3 : vector<1x8x32xbf16> to vector<8x32xbf16>
    %5 = vector.shape_cast %4 : vector<8x32xbf16> to vector<1x8x32xbf16>
    %6 = vector.shape_cast %5 : vector<1x8x32xbf16> to vector<1x8x32xbf16>
    %7 = vector.broadcast %6 : vector<1x8x32xbf16> to vector<4x8x32xbf16>
    %c0_3 = arith.constant 0 : index
    %c0_4 = arith.constant 0 : index
    %c0_5 = arith.constant 0 : index
    %8 = vector.load %arg5[%c0_3, %c0_4, %c0_5] : memref<1x8x32xbf16, #tpu.memory_space<vmem>>, vector<1x8x32xbf16>
    %9 = vector.shape_cast %8 : vector<1x8x32xbf16> to vector<8x32xbf16>
    %10 = vector.shape_cast %9 : vector<8x32xbf16> to vector<1x8x32xbf16>
    %11 = vector.shape_cast %10 : vector<1x8x32xbf16> to vector<1x8x32xbf16>
    %12 = vector.broadcast %11 : vector<1x8x32xbf16> to vector<4x8x32xbf16>
    %c0_6 = arith.constant 0 : index
    %c0_7 = arith.constant 0 : index
    %c0_8 = arith.constant 0 : index
    %13 = vector.load %arg7[%c0_6, %c0_7, %c0_8] : memref<4x32x8xbf16, #tpu.memory_space<vmem>>, vector<4x32x8xbf16>
    "tpu.trace_start"() <{level = 10 : i32, message = "hkd,hde->hke"}> : () -> ()
    %cst = arith.constant dense<0.000000e+00> : vector<4x8x8xf32>
    %14 = tpu.matmul %7, %13, %cst {dimension_numbers = #tpu.dot_dimension_numbers<[2], [1], [1], [2], [0, 0, 0, 1, 1, 2], [0], [0]>} : vector<4x8x32xbf16>, vector<4x32x8xbf16>, vector<4x8x8xf32> -> vector<4x8x8xf32>
    "tpu.trace_stop"() : () -> ()
    %15 = arith.truncf %14 : vector<4x8x8xf32> to vector<4x8x8xbf16>
    %c0_9 = arith.constant 0 : index
    %c0_10 = arith.constant 0 : index
    %c0_11 = arith.constant 0 : index
    %16 = vector.load %arg8[%c0_9, %c0_10, %c0_11] : memref<4x32x8xbf16, #tpu.memory_space<vmem>>, vector<4x32x8xbf16>
    "tpu.trace_start"() <{level = 10 : i32, message = "hkd,hde->hke"}> : () -> ()
    %cst_12 = arith.constant dense<0.000000e+00> : vector<4x8x8xf32>
    %17 = tpu.matmul %12, %16, %cst_12 {dimension_numbers = #tpu.dot_dimension_numbers<[2], [1], [1], [2], [0, 0, 0, 1, 1, 2], [0], [0]>} : vector<4x8x32xbf16>, vector<4x32x8xbf16>, vector<4x8x8xf32> -> vector<4x8x8xf32>
    "tpu.trace_stop"() : () -> ()
    %18 = arith.truncf %17 : vector<4x8x8xf32> to vector<4x8x8xbf16>
    %c0_13 = arith.constant 0 : index
    %c0_14 = arith.constant 0 : index
    %c0_15 = arith.constant 0 : index
    %19 = vector.load %arg11[%c0_13, %c0_14, %c0_15] : memref<4x8x8xbf16, #tpu.memory_space<vmem>>, vector<4x8x8xbf16>
    "tpu.trace_start"() <{level = 10 : i32, message = "hqe,hke->hqk"}> : () -> ()
    %cst_16 = arith.constant dense<0.000000e+00> : vector<4x8x8xf32>
    %20 = tpu.matmul %19, %15, %cst_16 {dimension_numbers = #tpu.dot_dimension_numbers<[2], [2], [1], [1], [0, 0, 0, 1, 1, 1], [0], [0]>} : vector<4x8x8xbf16>, vector<4x8x8xbf16>, vector<4x8x8xf32> -> vector<4x8x8xf32>
    "tpu.trace_stop"() : () -> ()
    %c0_17 = arith.constant 0 : index
    %c0_18 = arith.constant 0 : index
    %c0_19 = arith.constant 0 : index
    %21 = vector.load %arg12[%c0_17, %c0_18, %c0_19] : memref<4x8x1xf32, #tpu.memory_space<vmem>>, vector<4x8x1xf32>
    %cst_20 = arith.constant dense<0xFF800000> : vector<4x8xf32>
    %22 = vector.multi_reduction <maximumf>, %20, %cst_20 [2] : vector<4x8x8xf32> to vector<4x8xf32>
    %23 = vector.shape_cast %22 : vector<4x8xf32> to vector<4x8x1xf32>
    %24 = arith.maximumf %21, %23 : vector<4x8x1xf32>
    %25 = arith.subf %21, %24 : vector<4x8x1xf32>
    %26 = math.exp %25 : vector<4x8x1xf32>
    %27 = vector.broadcast %24 : vector<4x8x1xf32> to vector<4x8x8xf32>
    %28 = arith.subf %20, %27 : vector<4x8x8xf32>
    %29 = math.exp %28 : vector<4x8x8xf32>
    %c0_21 = arith.constant 0 : index
    %c0_22 = arith.constant 0 : index
    %c0_23 = arith.constant 0 : index
    %30 = vector.load %arg13[%c0_21, %c0_22, %c0_23] : memref<4x8x1xf32, #tpu.memory_space<vmem>>, vector<4x8x1xf32>
    %31 = arith.mulf %26, %30 : vector<4x8x1xf32>
    %cst_24 = arith.constant dense<0.000000e+00> : vector<4x8xf32>
    %32 = vector.multi_reduction <add>, %29, %cst_24 [2] : vector<4x8x8xf32> to vector<4x8xf32>
    %33 = vector.shape_cast %32 : vector<4x8xf32> to vector<4x8x1xf32>
    %34 = arith.addf %31, %33 : vector<4x8x1xf32>
    %c0_25 = arith.constant 0 : index
    %c0_26 = arith.constant 0 : index
    %c0_27 = arith.constant 0 : index
    %35 = vector.load %arg13[%c0_25, %c0_26, %c0_27] : memref<4x8x1xf32, #tpu.memory_space<vmem>>, vector<4x8x1xf32>
    tpu.vector_store %arg13[%c0_25, %c0_26, %c0_27], %34 {strides = array<i32>} : memref<4x8x1xf32, #tpu.memory_space<vmem>>, vector<4x8x1xf32>,
    %36 = arith.truncf %29 : vector<4x8x8xf32> to vector<4x8x8xbf16>
    %c0_28 = arith.constant 0 : index
    %c0_29 = arith.constant 0 : index
    %c0_30 = arith.constant 0 : index
    %37 = vector.load %arg14[%c0_28, %c0_29, %c0_30] : memref<4x8x8xf32, #tpu.memory_space<vmem>>, vector<4x8x8xf32>
    %38 = vector.broadcast %26 : vector<4x8x1xf32> to vector<4x8x8xf32>
    %39 = arith.mulf %38, %37 : vector<4x8x8xf32>
    "tpu.trace_start"() <{level = 10 : i32, message = "hqk,hke->hqe"}> : () -> ()
    %cst_31 = arith.constant dense<0.000000e+00> : vector<4x8x8xf32>
    %40 = tpu.matmul %36, %18, %cst_31 {dimension_numbers = #tpu.dot_dimension_numbers<[2], [1], [1], [2], [0, 0, 0, 1, 1, 2], [0], [0]>} : vector<4x8x8xbf16>, vector<4x8x8xbf16>, vector<4x8x8xf32> -> vector<4x8x8xf32>
    "tpu.trace_stop"() : () -> ()
    %41 = arith.addf %39, %40 : vector<4x8x8xf32>
    %c0_32 = arith.constant 0 : index
    %c0_33 = arith.constant 0 : index
    %c0_34 = arith.constant 0 : index
    %42 = vector.load %arg14[%c0_32, %c0_33, %c0_34] : memref<4x8x8xf32, #tpu.memory_space<vmem>>, vector<4x8x8xf32>
    tpu.vector_store %arg14[%c0_32, %c0_33, %c0_34], %41 {strides = array<i32>} : memref<4x8x8xf32, #tpu.memory_space<vmem>>, vector<4x8x8xf32>,
    %c0_35 = arith.constant 0 : index
    %c0_36 = arith.constant 0 : index
    %c0_37 = arith.constant 0 : index
    %43 = vector.load %arg12[%c0_35, %c0_36, %c0_37] : memref<4x8x1xf32, #tpu.memory_space<vmem>>, vector<4x8x1xf32>
    tpu.vector_store %arg12[%c0_35, %c0_36, %c0_37], %24 {strides = array<i32>} : memref<4x8x1xf32, #tpu.memory_space<vmem>>, vector<4x8x1xf32>,
    %c0_i32_38 = arith.constant 0 : i32
    %44 = arith.cmpi eq, %arg2, %c0_i32_38 : i32
    %45 = arith.extui %44 : i1 to i32
    %c0_i32_39 = arith.constant 0 : i32
    %46 = arith.cmpi ne, %45, %c0_i32_39 : i32
    scf.if %46 {
      %c0_40 = arith.constant 0 : index
      %c0_41 = arith.constant 0 : index
      %c0_42 = arith.constant 0 : index
      %47 = vector.load %arg14[%c0_40, %c0_41, %c0_42] : memref<4x8x8xf32, #tpu.memory_space<vmem>>, vector<4x8x8xf32>
      %c0_43 = arith.constant 0 : index
      %c0_44 = arith.constant 0 : index
      %c0_45 = arith.constant 0 : index
      %48 = vector.load %arg13[%c0_43, %c0_44, %c0_45] : memref<4x8x1xf32, #tpu.memory_space<vmem>>, vector<4x8x1xf32>
      %49 = tpu.reciprocal %48 {approx = true} : vector<4x8x1xf32> -> vector<4x8x1xf32>
      %50 = vector.broadcast %49 : vector<4x8x1xf32> to vector<4x8x8xf32>
      %51 = arith.mulf %47, %50 : vector<4x8x8xf32>
      %52 = arith.truncf %51 : vector<4x8x8xf32> to vector<4x8x8xbf16>
      %c0_46 = arith.constant 0 : index
      %c0_47 = arith.constant 0 : index
      %c0_48 = arith.constant 0 : index
      %53 = vector.load %arg9[%c0_46, %c0_47, %c0_48] : memref<4x8x32xbf16, #tpu.memory_space<vmem>>, vector<4x8x32xbf16>
      "tpu.trace_start"() <{level = 10 : i32, message = "hqv,hvd->hqd"}> : () -> ()
      %cst_49 = arith.constant dense<0.000000e+00> : vector<4x8x32xf32>
      %54 = tpu.matmul %52, %53, %cst_49 {dimension_numbers = #tpu.dot_dimension_numbers<[2], [1], [1], [2], [0, 0, 0, 1, 1, 2], [0], [0]>} : vector<4x8x8xbf16>, vector<4x8x32xbf16>, vector<4x8x32xf32> -> vector<4x8x32xf32>
      "tpu.trace_stop"() : () -> ()
      %cst_50 = arith.constant dense<0.000000e+00> : vector<8x32xf32>
      %55 = vector.multi_reduction <add>, %54, %cst_50 [0] : vector<4x8x32xf32> to vector<8x32xf32>
      %c0_51 = arith.constant 0 : index
      %c0_52 = arith.constant 0 : index
      %c0_53 = arith.constant 0 : index
      %56 = vector.load %arg10[%c0_51, %c0_52, %c0_53] : memref<1x8x32xf32, #tpu.memory_space<vmem>>, vector<1x8x32xf32>
      %57 = vector.shape_cast %56 : vector<1x8x32xf32> to vector<8x32xf32>
      %58 = vector.shape_cast %55 : vector<8x32xf32> to vector<1x8x32xf32>
      tpu.vector_store %arg10[%c0_51, %c0_52, %c0_53], %58 {strides = array<i32>} : memref<1x8x32xf32, #tpu.memory_space<vmem>>, vector<1x8x32xf32>,
    } else {
    }
    return
  }
  func.func @transform_0(%arg0: i32, %arg1: i32, %arg2: i32) -> (i32, i32, i32) {
    %c0_i32 = arith.constant 0 : i32
    %c0_i32_0 = arith.constant 0 : i32
    return %arg0, %arg1, %c0_i32 : i32, i32, i32
  }
  func.func @transform_1(%arg0: i32, %arg1: i32, %arg2: i32) -> (i32, i32, i32) {
    %c0_i32 = arith.constant 0 : i32
    %c0_i32_0 = arith.constant 0 : i32
    return %arg0, %arg2, %c0_i32 : i32, i32, i32
  }
  func.func @transform_2(%arg0: i32, %arg1: i32, %arg2: i32) -> (i32, i32, i32) {
    %c0_i32 = arith.constant 0 : i32
    %c0_i32_0 = arith.constant 0 : i32
    return %arg0, %arg2, %c0_i32 : i32, i32, i32
  }
  func.func @transform_3(%arg0: i32, %arg1: i32, %arg2: i32) -> (i32, i32, i32) {
    %c0_i32 = arith.constant 0 : i32
    %c0_i32_0 = arith.constant 0 : i32
    %c0_i32_1 = arith.constant 0 : i32
    %c0_i32_2 = arith.constant 0 : i32
    return %c0_i32, %c0_i32_0, %c0_i32_1 : i32, i32, i32
  }
  func.func @transform_4(%arg0: i32, %arg1: i32, %arg2: i32) -> (i32, i32, i32) {
    %c0_i32 = arith.constant 0 : i32
    %c0_i32_0 = arith.constant 0 : i32
    %c0_i32_1 = arith.constant 0 : i32
    %c0_i32_2 = arith.constant 0 : i32
    return %c0_i32, %c0_i32_0, %c0_i32_1 : i32, i32, i32
  }
  func.func @transform_5(%arg0: i32, %arg1: i32, %arg2: i32) -> (i32, i32, i32) {
    %c0_i32 = arith.constant 0 : i32
    %c0_i32_0 = arith.constant 0 : i32
    %c0_i32_1 = arith.constant 0 : i32
    %c0_i32_2 = arith.constant 0 : i32
    return %c0_i32, %c0_i32_0, %c0_i32_1 : i32, i32, i32
  }
  func.func @transform_6(%arg0: i32, %arg1: i32, %arg2: i32) -> (i32, i32, i32) {
    %c0_i32 = arith.constant 0 : i32
    %c0_i32_0 = arith.constant 0 : i32
    %c0_i32_1 = arith.constant 0 : i32
    %c0_i32_2 = arith.constant 0 : i32
    return %c0_i32, %c0_i32_0, %c0_i32_1 : i32, i32, i32
  }
  func.func @transform_7(%arg0: i32, %arg1: i32, %arg2: i32) -> (i32, i32, i32) {
    %c0_i32 = arith.constant 0 : i32
    %c0_i32_0 = arith.constant 0 : i32
    return %arg0, %arg1, %c0_i32 : i32, i32, i32
  }
}

</mosaic_0001>

<llo_original>
// kernel: tpu_custom_call.1
$region0: #{tpu_custom_call.1}
  #allocation0 [shape = 'u32[]', space=smem, size = 0x4, offset = 0x4, fixed_abs, tag = 'smem constant byte address 0x4 - core index']
  #allocation1 [shape = 'u32[144,128]{1,0:T(1,128)}', space=vmem, size = 0x12000, scoped, tag = 'internal scratch']
  #allocation2 [shape = 'bf16[4,8,8]{2,1,0:T(8,128)(2,1)}', space=vmem, size = 0x2000, scoped, tag = 'scratch operand']
  #allocation3 [shape = 'f32[4,8,1]{2,1,0:T(8,128)}', space=vmem, size = 0x4000, scoped, tag = 'scratch operand']
  #allocation4 [shape = 'f32[4,8,1]{2,1,0:T(8,128)}', space=vmem, size = 0x4000, scoped, tag = 'scratch operand']
  #allocation5 [shape = 'f32[4,8,8]{2,1,0:T(8,128)}', space=vmem, size = 0x4000, scoped, tag = 'scratch operand']
  %s0 = inlined_call_operand.vmem [shape: bf16[2,8,32], index: 0, kind: input, shape index: {}]
  %s1 = inlined_call_operand.vmem [shape: bf16[2,8,32], index: 1, kind: input, shape index: {}]
  %s2 = inlined_call_operand.vmem [shape: bf16[2,8,32], index: 2, kind: input, shape index: {}]
  %s3 = inlined_call_operand.vmem [shape: bf16[4,32,8], index: 3, kind: input, shape index: {}]
  %s4 = inlined_call_operand.vmem [shape: bf16[4,32,8], index: 4, kind: input, shape index: {}]
  %s5 = inlined_call_operand.vmem [shape: bf16[4,32,8], index: 5, kind: input, shape index: {}]
  %s6 = inlined_call_operand.vmem [shape: bf16[4,8,32], index: 6, kind: input, shape index: {}]
  %s7 = inlined_call_operand.hbm [shape: f32[2,8,32], index: 7, kind: output, shape index: {}]
  %s8 = sld [smem:[#allocation0]]
  $region69: #{tpu_custom_call.1} parent=0
    _
  %s10 = ssub.s32 1, %s8
  %s11 = scalar_select 0, %s10, %s8
  $region1: #{tpu_custom_call.1} parent=0
    #allocation6 [shape = 'u8[8192]{0}', space=vmem, size = 0x2000, scoped, tag = 'output window, operand 0']
    #allocation7 [shape = 's32[2]{0}', space=sflag, size = 0x8, scoped, tag = 'scoped memory for tpu_custom_call.1']
    %12 = vsyncpa [#allocation7], 0
    %s13 = scalar_lea.sflag [#allocation7], 1
    %14 = vsyncpa %s13, 0
    loop: start=0, step=1, limit=4
    $region2: #{tpu_custom_call.1} parent=1 // loop_pre_header
      _
    $region3: #{tpu_custom_call.1} parent=1 // loop_header
      %s16 = sphi 0, %s20
      %p17 = scmp.ge.s32.totalorder %s16, 4
      %s23 = sphi 0, %s42
      %s24 = sphi 0, %s38
      %s25 = sphi 0, %s34
      %s26 = sphi 0, %s23
      %s27 = sphi 0, %s24
      %s28 = sphi 0, %s25
      %s29 = sphi 0, %s26
      %s30 = sphi 0, %s27
      %s31 = sphi 0, %s28
      %s47 = sphi 0, %s49
      %s50 = sphi 0, %s47
      %s51 = sphi 0, %s50
      %s67 = sphi 0, %s51
      %s75 = sphi 0, %s77
      %s78 = sphi 0, %s75
      %s79 = sphi 0, %s78
      %s95 = sphi 0, %s79
      %s103 = sphi 0, %s105
      %s106 = sphi 0, %s103
      %s107 = sphi 0, %s106
      %s123 = sphi 0, %s107
      %s127 = sphi 0, %s127
      %s129 = sphi 0, %s127
      %s130 = sphi 0, %s129
      %s144 = sphi 0, %s130
      %s148 = sphi 0, %s148
      %s150 = sphi 0, %s148
      %s151 = sphi 0, %s150
      %s165 = sphi 0, %s151
      %s169 = sphi 0, %s169
      %s171 = sphi 0, %s169
      %s172 = sphi 0, %s171
      %s186 = sphi 0, %s172
      %s190 = sphi 0, %s190
      %s192 = sphi 0, %s190
      %s193 = sphi 0, %s192
      %s207 = sphi 0, %s193
      %s215 = sphi 0, %s217
      %s218 = sphi 0, %s215
      %s219 = sphi 0, %s218
      %s235 = sphi 0, %s219
    $region4: #{tpu_custom_call.1} parent=1 // loop_header_branch
      %19 = sbr.rel (%p17) target = $region8
    $region5: #{tpu_custom_call.1} parent=1 // loop_body
      %s21 = ssub.s32 %s16, 1
      %s22 = ssub.s32 %s16, 2
      %s32 = sadd.s32 1, %s25
      %p33 = scmp.ge.s32.totalorder %s32, 1
      %s34 = scalar_select %p33, 0, %s32
      %s35 = sadd.s32 1, %s24
      %s36 = scalar_select %p33, %s35, %s24
      %p37 = scmp.ge.s32.totalorder %s36, 1
      %s38 = scalar_select %p37, 0, %s36
      %s39 = sadd.s32 1, %s23
      %s40 = scalar_select %p37, %s39, %s23
      %p41 = scmp.ge.s32.totalorder %s40, 2
      %s42 = scalar_select %p41, 0, %s40
      %s43 = ssub.s32 %s23, %s42
      %s44 = ssub.s32 %s24, %s38
      %s45 = sor.u32 %s43, %s44
      %p46 = scmp.eq.s32.totalorder %s45, 0
      %s48 = sadd.s32 %s47, 1
      %s49 = scalar_select %p46, %s47, %s48
      %p52 = pneg %p46
      %p53 = scmp.eq.s32.totalorder %s16, 1
      %p54 = por %p52, %p53
      %p55 = scmp.ne.s32.totalorder %s47, %s50
      %p56 = scmp.eq.s32.totalorder %s16, 0
      %p57 = por %p55, %p56
      %p58 = scmp.ne.s32.totalorder %s47, %s50
      %p59 = scmp.eq.s32.totalorder %s21, 1
      %p60 = por %p58, %p59
      %p61 = scmp.ne.s32.totalorder %s50, %s51
      %p62 = scmp.eq.s32.totalorder %s21, 0
      %p63 = por %p61, %p62
      %p64 = scmp.ne.s32.totalorder %s50, %s51
      %p65 = scmp.eq.s32.totalorder %s22, 1
      %p66 = por %p64, %p65
      %p68 = scmp.ne.s32.totalorder %s51, %s67
      %p69 = scmp.eq.s32.totalorder %s22, 0
      %p70 = por %p68, %p69
      %s71 = ssub.s32 %s23, %s42
      %s72 = ssub.s32 %s25, %s34
      %s73 = sor.u32 %s71, %s72
      %p74 = scmp.eq.s32.totalorder %s73, 0
      %s76 = sadd.s32 %s75, 1
      %s77 = scalar_select %p74, %s75, %s76
      %p80 = pneg %p74
      %p81 = scmp.eq.s32.totalorder %s16, 1
      %p82 = por %p80, %p81
      %p83 = scmp.ne.s32.totalorder %s75, %s78
      %p84 = scmp.eq.s32.totalorder %s16, 0
      %p85 = por %p83, %p84
      %p86 = scmp.ne.s32.totalorder %s75, %s78
      %p87 = scmp.eq.s32.totalorder %s21, 1
      %p88 = por %p86, %p87
      %p89 = scmp.ne.s32.totalorder %s78, %s79
      %p90 = scmp.eq.s32.totalorder %s21, 0
      %p91 = por %p89, %p90
      %p92 = scmp.ne.s32.totalorder %s78, %s79
      %p93 = scmp.eq.s32.totalorder %s22, 1
      %p94 = por %p92, %p93
      %p96 = scmp.ne.s32.totalorder %s79, %s95
      %p97 = scmp.eq.s32.totalorder %s22, 0
      %p98 = por %p96, %p97
      %s99 = ssub.s32 %s23, %s42
      %s100 = ssub.s32 %s25, %s34
      %s101 = sor.u32 %s99, %s100
      %p102 = scmp.eq.s32.totalorder %s101, 0
      %s104 = sadd.s32 %s103, 1
      %s105 = scalar_select %p102, %s103, %s104
      %p108 = pneg %p102
      %p109 = scmp.eq.s32.totalorder %s16, 1
      %p110 = por %p108, %p109
      %p111 = scmp.ne.s32.totalorder %s103, %s106
      %p112 = scmp.eq.s32.totalorder %s16, 0
      %p113 = por %p111, %p112
      %p114 = scmp.ne.s32.totalorder %s103, %s106
      %p115 = scmp.eq.s32.totalorder %s21, 1
      %p116 = por %p114, %p115
      %p117 = scmp.ne.s32.totalorder %s106, %s107
      %p118 = scmp.eq.s32.totalorder %s21, 0
      %p119 = por %p117, %p118
      %p120 = scmp.ne.s32.totalorder %s106, %s107
      %p121 = scmp.eq.s32.totalorder %s22, 1
      %p122 = por %p120, %p121
      %p124 = scmp.ne.s32.totalorder %s107, %s123
      %p125 = scmp.eq.s32.totalorder %s22, 0
      %p126 = por %p124, %p125
      %s128 = sadd.s32 %s127, 1
      %p131 = scmp.eq.s32.totalorder %s16, 1
      %p132 = scmp.ne.s32.totalorder %s127, %s129
      %p133 = scmp.eq.s32.totalorder %s16, 0
      %p134 = por %p132, %p133
      %p135 = scmp.ne.s32.totalorder %s127, %s129
      %p136 = scmp.eq.s32.totalorder %s21, 1
      %p137 = por %p135, %p136
      %p138 = scmp.ne.s32.totalorder %s129, %s130
      %p139 = scmp.eq.s32.totalorder %s21, 0
      %p140 = por %p138, %p139
      %p141 = scmp.ne.s32.totalorder %s129, %s130
      %p142 = scmp.eq.s32.totalorder %s22, 1
      %p143 = por %p141, %p142
      %p145 = scmp.ne.s32.totalorder %s130, %s144
      %p146 = scmp.eq.s32.totalorder %s22, 0
      %p147 = por %p145, %p146
      %s149 = sadd.s32 %s148, 1
      %p152 = scmp.eq.s32.totalorder %s16, 1
      %p153 = scmp.ne.s32.totalorder %s148, %s150
      %p154 = scmp.eq.s32.totalorder %s16, 0
      %p155 = por %p153, %p154
      %p156 = scmp.ne.s32.totalorder %s148, %s150
      %p157 = scmp.eq.s32.totalorder %s21, 1
      %p158 = por %p156, %p157
      %p159 = scmp.ne.s32.totalorder %s150, %s151
      %p160 = scmp.eq.s32.totalorder %s21, 0
      %p161 = por %p159, %p160
      %p162 = scmp.ne.s32.totalorder %s150, %s151
      %p163 = scmp.eq.s32.totalorder %s22, 1
      %p164 = por %p162, %p163
      %p166 = scmp.ne.s32.totalorder %s151, %s165
      %p167 = scmp.eq.s32.totalorder %s22, 0
      %p168 = por %p166, %p167
      %s170 = sadd.s32 %s169, 1
      %p173 = scmp.eq.s32.totalorder %s16, 1
      %p174 = scmp.ne.s32.totalorder %s169, %s171
      %p175 = scmp.eq.s32.totalorder %s16, 0
      %p176 = por %p174, %p175
      %p177 = scmp.ne.s32.totalorder %s169, %s171
      %p178 = scmp.eq.s32.totalorder %s21, 1
      %p179 = por %p177, %p178
      %p180 = scmp.ne.s32.totalorder %s171, %s172
      %p181 = scmp.eq.s32.totalorder %s21, 0
      %p182 = por %p180, %p181
      %p183 = scmp.ne.s32.totalorder %s171, %s172
      %p184 = scmp.eq.s32.totalorder %s22, 1
      %p185 = por %p183, %p184
      %p187 = scmp.ne.s32.totalorder %s172, %s186
      %p188 = scmp.eq.s32.totalorder %s22, 0
      %p189 = por %p187, %p188
      %s191 = sadd.s32 %s190, 1
      %p194 = scmp.eq.s32.totalorder %s16, 1
      %p195 = scmp.ne.s32.totalorder %s190, %s192
      %p196 = scmp.eq.s32.totalorder %s16, 0
      %p197 = por %p195, %p196
      %p198 = scmp.ne.s32.totalorder %s190, %s192
      %p199 = scmp.eq.s32.totalorder %s21, 1
      %p200 = por %p198, %p199
      %p201 = scmp.ne.s32.totalorder %s192, %s193
      %p202 = scmp.eq.s32.totalorder %s21, 0
      %p203 = por %p201, %p202
      %p204 = scmp.ne.s32.totalorder %s192, %s193
      %p205 = scmp.eq.s32.totalorder %s22, 1
      %p206 = por %p204, %p205
      %p208 = scmp.ne.s32.totalorder %s193, %s207
      %p209 = scmp.eq.s32.totalorder %s22, 0
      %p210 = por %p208, %p209
      %s211 = ssub.s32 %s23, %s42
      %s212 = ssub.s32 %s24, %s38
      %s213 = sor.u32 %s211, %s212
      %p214 = scmp.eq.s32.totalorder %s213, 0
      %s216 = sadd.s32 %s215, 1
      %s217 = scalar_select %p214, %s215, %s216
      %p220 = pneg %p214
      %p221 = scmp.eq.s32.totalorder %s16, 1
      %p222 = por %p220, %p221
      %p223 = scmp.ne.s32.totalorder %s215, %s218
      %p224 = scmp.eq.s32.totalorder %s16, 0
      %p225 = por %p223, %p224
      %p226 = scmp.ne.s32.totalorder %s215, %s218
      %p227 = scmp.eq.s32.totalorder %s21, 1
      %p228 = por %p226, %p227
      %p229 = scmp.ne.s32.totalorder %s218, %s219
      %p230 = scmp.eq.s32.totalorder %s21, 0
      %p231 = por %p229, %p230
      %p232 = scmp.ne.s32.totalorder %s218, %s219
      %p233 = scmp.eq.s32.totalorder %s22, 1
      %p234 = por %p232, %p233
      %p236 = scmp.ne.s32.totalorder %s219, %s235
      %p237 = scmp.eq.s32.totalorder %s22, 0
      %p238 = por %p236, %p237
      %p239 = scmp.le.s32.totalorder 1, %s16
      %p240 = scmp.lt.s32.totalorder %s16, 3
      %p241 = pnand %p239, %p240
      %p242 = pneg %p241
      // Predicated region
      $region9: #{tpu_custom_call.1} parent=5 // pred_check
        _
      $region10: #{tpu_custom_call.1} parent=5 // pred_check_branch
        %244 = sbr.rel (%p241) target = $region12
      $region11: #{tpu_custom_call.1} parent=5 // pred_region
        %s245 = ssub.s32 %s16, 1
        // Predicated region
        $region13: #{tpu_custom_call.1} parent=11 // pred_check
          %p246 = pneg %p140
        $region14: #{tpu_custom_call.1} parent=11 // pred_check_branch
          %248 = sbr.rel (%p246) target = $region16
        $region15: #{tpu_custom_call.1} parent=11 // pred_region
          _
        $region16: #{tpu_custom_call.1} parent=11 // pred_fallthru
          _
        // Predicated region
        $region17: #{tpu_custom_call.1} parent=11 // pred_check
          %p249 = pneg %p161
        $region18: #{tpu_custom_call.1} parent=11 // pred_check_branch
          %251 = sbr.rel (%p249) target = $region20
        $region19: #{tpu_custom_call.1} parent=11 // pred_region
          _
        $region20: #{tpu_custom_call.1} parent=11 // pred_fallthru
          _
        // Predicated region
        $region21: #{tpu_custom_call.1} parent=11 // pred_check
          %p252 = pneg %p182
        $region22: #{tpu_custom_call.1} parent=11 // pred_check_branch
          %254 = sbr.rel (%p252) target = $region24
        $region23: #{tpu_custom_call.1} parent=11 // pred_region
          _
        $region24: #{tpu_custom_call.1} parent=11 // pred_fallthru
          _
        // Predicated region
        $region25: #{tpu_custom_call.1} parent=11 // pred_check
          %p255 = pneg %p203
        $region26: #{tpu_custom_call.1} parent=11 // pred_check_branch
          %257 = sbr.rel (%p255) target = $region28
        $region27: #{tpu_custom_call.1} parent=11 // pred_region
          _
        $region28: #{tpu_custom_call.1} parent=11 // pred_fallthru
          _
      $region12: #{tpu_custom_call.1} parent=5 // pred_fallthru
        _
      %p258 = scmp.lt.s32.totalorder %s16, 2
      // Predicated region
      $region29: #{tpu_custom_call.1} parent=5 // pred_check
        %p259 = pneg %p258
      $region30: #{tpu_custom_call.1} parent=5 // pred_check_branch
        %261 = sbr.rel (%p259) target = $region32
      $region31: #{tpu_custom_call.1} parent=5 // pred_region
        // Predicated region
        $region33: #{tpu_custom_call.1} parent=31 // pred_check
          %p262 = pneg %p57
        $region34: #{tpu_custom_call.1} parent=31 // pred_check_branch
          %264 = sbr.rel (%p262) target = $region36
        $region35: #{tpu_custom_call.1} parent=31 // pred_region
          %p265 = scmp.lt.s32.totalorder %s23, 1
          %s266 = scalar_select %p265, %s23, 1
          %p267 = scmp.lt.s32.totalorder %s24, 0
          %s268 = scalar_select %p267, %s24, 0
          %s269 = sadd.s32 %s268, %s266
          %s270 = smul.addr %s269, 4
          %s271 = scalar_lea.vmem %s0, %s270
        $region36: #{tpu_custom_call.1} parent=31 // pred_fallthru
          _
        // Predicated region
        $region37: #{tpu_custom_call.1} parent=31 // pred_check
          %p272 = pneg %p85
        $region38: #{tpu_custom_call.1} parent=31 // pred_check_branch
          %274 = sbr.rel (%p272) target = $region40
        $region39: #{tpu_custom_call.1} parent=31 // pred_region
          %p275 = scmp.lt.s32.totalorder %s23, 1
          %s276 = scalar_select %p275, %s23, 1
          %p277 = scmp.lt.s32.totalorder %s25, 0
          %s278 = scalar_select %p277, %s25, 0
          %s279 = sadd.s32 %s278, %s276
          %s280 = smul.addr %s279, 4
          %s281 = scalar_lea.vmem %s1, %s280
        $region40: #{tpu_custom_call.1} parent=31 // pred_fallthru
          _
        // Predicated region
        $region41: #{tpu_custom_call.1} parent=31 // pred_check
          %p282 = pneg %p113
        $region42: #{tpu_custom_call.1} parent=31 // pred_check_branch
          %284 = sbr.rel (%p282) target = $region44
        $region43: #{tpu_custom_call.1} parent=31 // pred_region
          %p285 = scmp.lt.s32.totalorder %s23, 1
          %s286 = scalar_select %p285, %s23, 1
          %p287 = scmp.lt.s32.totalorder %s25, 0
          %s288 = scalar_select %p287, %s25, 0
          %s289 = sadd.s32 %s288, %s286
          %s290 = smul.addr %s289, 4
          %s291 = scalar_lea.vmem %s2, %s290
        $region44: #{tpu_custom_call.1} parent=31 // pred_fallthru
          _
      $region32: #{tpu_custom_call.1} parent=5 // pred_fallthru
        _
      %p292 = scmp.le.s32.totalorder 1, %s16
      %p293 = scmp.lt.s32.totalorder %s16, 3
      %p294 = pnand %p292, %p293
      %p295 = pneg %p294
      // Predicated region
      $region45: #{tpu_custom_call.1} parent=5 // pred_check
        _
      $region46: #{tpu_custom_call.1} parent=5 // pred_check_branch
        %297 = sbr.rel (%p294) target = $region48
      $region47: #{tpu_custom_call.1} parent=5 // pred_region
        %s298 = ssub.s32 %s16, 1
        %p299 = scmp.lt.s32.totalorder %s26, 1
        %s300 = scalar_select %p299, %s26, 1
        %p301 = scmp.lt.s32.totalorder %s27, 0
        %s302 = scalar_select %p301, %s27, 0
        %s303 = sadd.s32 %s302, %s300
        %s304 = smul.addr %s303, 4
        %s305 = scalar_lea.vmem %s0, %s304
        %p306 = pneg %p63
        %p307 = pneg %p60
        %p308 = scmp.lt.s32.totalorder %s26, 1
        %s309 = scalar_select %p308, %s26, 1
        %p310 = scmp.lt.s32.totalorder %s28, 0
        %s311 = scalar_select %p310, %s28, 0
        %s312 = sadd.s32 %s311, %s309
        %s313 = smul.addr %s312, 4
        %s314 = scalar_lea.vmem %s1, %s313
        %p315 = pneg %p91
        %p316 = pneg %p88
        %p317 = scmp.lt.s32.totalorder %s26, 1
        %s318 = scalar_select %p317, %s26, 1
        %p319 = scmp.lt.s32.totalorder %s28, 0
        %s320 = scalar_select %p319, %s28, 0
        %s321 = sadd.s32 %s320, %s318
        %s322 = smul.addr %s321, 4
        %s323 = scalar_lea.vmem %s2, %s322
        %p324 = pneg %p119
        %p325 = pneg %p116
        %p326 = pneg %p140
        %p327 = pneg %p137
        %p328 = pneg %p161
        %p329 = pneg %p158
        %p330 = pneg %p182
        %p331 = pneg %p179
        %p332 = pneg %p203
        %p333 = pneg %p200
        %p334 = pneg %p231
        %p335 = pneg %p228
        %s336 = sand.u32 %s218, 1
        %s337 = scalar_lea.sflag [#allocation7], %s336
        %s338 = sand.u32 %s218, 1
        %s339 = smul.addr %s338, 8
        %s340 = scalar_lea.vmem [#allocation6], %s339
        %p341 = scmp.lt.s32.totalorder %s26, 1
        %s342 = scalar_select %p341, %s26, 1
        %p343 = scmp.lt.s32.totalorder %s27, 0
        %s344 = scalar_select %p343, %s27, 0
        %s345 = sadd.s32 %s344, %s342
        %s346 = smul.addr %s345, 4
        %s347 = scalar_lea.vmem %s0, %s346
        %p348 = scmp.lt.s32.totalorder %s26, 1
        %s349 = scalar_select %p348, %s26, 1
        %p350 = scmp.lt.s32.totalorder %s28, 0
        %s351 = scalar_select %p350, %s28, 0
        %s352 = sadd.s32 %s351, %s349
        %s353 = smul.addr %s352, 4
        %s354 = scalar_lea.vmem %s1, %s353
        %p355 = scmp.lt.s32.totalorder %s26, 1
        %s356 = scalar_select %p355, %s26, 1
        %p357 = scmp.lt.s32.totalorder %s28, 0
        %s358 = scalar_select %p357, %s28, 0
        %s359 = sadd.s32 %s358, %s356
        %s360 = smul.addr %s359, 4
        %s361 = scalar_lea.vmem %s2, %s360
        %p363 = scmp.eq.s32.totalorder %s28, 0
        // Predicated region
        $region49: #{tpu_custom_call.1} parent=47 // pred_check
          %p364 = pneg %p363
        $region50: #{tpu_custom_call.1} parent=47 // pred_check_branch
          %366 = sbr.rel (%p364) target = $region52
        $region51: #{tpu_custom_call.1} parent=47 // pred_region
          %v367 = vld [vmem:[%s347] sm:$0xf]
          %v368 = vld [vmem:[%s3] sm:$0xf]
          %v369 = vld [vmem:[%s3 + $0x4] sm:$0xf]
          %v370 = vld [vmem:[%s3 + $0x8] sm:$0xf]
          %v371 = vld [vmem:[%s3 + $0xc] sm:$0xf]
          %v372 = vld [vmem:[%s3 + $0x10] sm:$0xf]
          %v373 = vld [vmem:[%s3 + $0x14] sm:$0xf]
          %v374 = vld [vmem:[%s3 + $0x18] sm:$0xf]
          %v375 = vld [vmem:[%s3 + $0x1c] sm:$0xf]
          %v376 = vld [vmem:[%s3 + $0x20] sm:$0xf]
          %v377 = vld [vmem:[%s3 + $0x24] sm:$0xf]
          %v378 = vld [vmem:[%s3 + $0x28] sm:$0xf]
          %v379 = vld [vmem:[%s3 + $0x2c] sm:$0xf]
          %v380 = vld [vmem:[%s3 + $0x30] sm:$0xf]
          %v381 = vld [vmem:[%s3 + $0x34] sm:$0xf]
          %v382 = vld [vmem:[%s3 + $0x38] sm:$0xf]
          %v383 = vld [vmem:[%s3 + $0x3c] sm:$0xf]
          %v388 = vunpack.c.l.b16 %v368
          %v389 = vunpack.c.l.b16 %v369
          %v390 = vunpack.c.l.b16 %v370
          %v391 = vunpack.c.l.b16 %v371
          %v392 = vpack.c.b16 %v389, %v388
          %v393 = vpack.c.b16 %v391, %v390
          %vm396 = vcmask 261120
          %v398 = vsel %vm396, %v367, 0
          %400 = vmatprep.subr.bf16.mxu0 0
          %401 = vmatpush1.bf16.msra.mxu0 %v392
          %402 = vmatprep.subr.bf16.mxu0 0
          %403 = vmatpush1.bf16.msra.mxu0 %v393
          %404 = vmatprep.subr.bf16.mxu0 0
          %405 = vmatpush1.bf16.msra.mxu0 0
          %406 = vmatprep.subr.bf16.mxu0 0
          %407 = vmatpush1.bf16.msra.mxu0 0
          %408 = vmatprep.subr.bf16.mxu0 0
          %409 = vmatpush1.bf16.msra.mxu0 0
          %410 = vmatprep.subr.bf16.mxu0 0
          %411 = vmatpush1.bf16.msra.mxu0 0
          %412 = vmatprep.subr.bf16.mxu0 0
          %413 = vmatpush1.bf16.msra.mxu0 0
          %414 = vmatprep.subr.bf16.mxu0 0
          %415 = vmatpush1.bf16.msra.mxu0 0
          %416 = vmatprep.subr.bf16.mxu0 0
          %417 = vmatpush1.bf16.msra.mxu0 0
          %418 = vmatprep.subr.bf16.mxu0 0
          %419 = vmatpush1.bf16.msra.mxu0 0
          %420 = vmatprep.subr.bf16.mxu0 0
          %421 = vmatpush1.bf16.msra.mxu0 0
          %422 = vmatprep.subr.bf16.mxu0 0
          %423 = vmatpush1.bf16.msra.mxu0 0
          %424 = vmatprep.subr.bf16.mxu0 0
          %425 = vmatpush1.bf16.msra.mxu0 0
          %426 = vmatprep.subr.bf16.mxu0 0
          %427 = vmatpush1.bf16.msra.mxu0 0
          %428 = vmatprep.subr.bf16.mxu0 0
          %429 = vmatpush1.bf16.msra.mxu0 0
          %430 = vmatprep.subr.bf16.mxu0 0
          %431 = vmatpush1.bf16.msra.mxu0 0
          %432 = vmatprep.mubr.bf16.mxu0 0
          %433 = vmatmul.mubr.bf16.gmra.mrb[0].mxu0 %v398
          %v434 = vpop.f32.mrb[0].mxu0
          %v435 = vadd.f32 0.0, %v434
          %v436 = vpop.f32.mrb[0].mxu0
          %v437 = vpop.f32.mrb[0].mxu0
          %v438 = vpop.f32.mrb[0].mxu0
          %439 = vdwg.mxu0
          %v444 = vunpack.c.l.b16 %v372
          %v445 = vunpack.c.l.b16 %v373
          %v446 = vunpack.c.l.b16 %v374
          %v447 = vunpack.c.l.b16 %v375
          %v448 = vpack.c.b16 %v445, %v444
          %v449 = vpack.c.b16 %v447, %v446
          %452 = vmatprep.subr.bf16.mxu0 0
          %453 = vmatpush1.bf16.msra.mxu0 %v448
          %454 = vmatprep.subr.bf16.mxu0 0
          %455 = vmatpush1.bf16.msra.mxu0 %v449
          %456 = vmatprep.subr.bf16.mxu0 0
          %457 = vmatpush1.bf16.msra.mxu0 0
          %458 = vmatprep.subr.bf16.mxu0 0
          %459 = vmatpush1.bf16.msra.mxu0 0
          %460 = vmatprep.subr.bf16.mxu0 0
          %461 = vmatpush1.bf16.msra.mxu0 0
          %462 = vmatprep.subr.bf16.mxu0 0
          %463 = vmatpush1.bf16.msra.mxu0 0
          %464 = vmatprep.subr.bf16.mxu0 0
          %465 = vmatpush1.bf16.msra.mxu0 0
          %466 = vmatprep.subr.bf16.mxu0 0
          %467 = vmatpush1.bf16.msra.mxu0 0
          %468 = vmatprep.subr.bf16.mxu0 0
          %469 = vmatpush1.bf16.msra.mxu0 0
          %470 = vmatprep.subr.bf16.mxu0 0
          %471 = vmatpush1.bf16.msra.mxu0 0
          %472 = vmatprep.subr.bf16.mxu0 0
          %473 = vmatpush1.bf16.msra.mxu0 0
          %474 = vmatprep.subr.bf16.mxu0 0
          %475 = vmatpush1.bf16.msra.mxu0 0
          %476 = vmatprep.subr.bf16.mxu0 0
          %477 = vmatpush1.bf16.msra.mxu0 0
          %478 = vmatprep.subr.bf16.mxu0 0
          %479 = vmatpush1.bf16.msra.mxu0 0
          %480 = vmatprep.subr.bf16.mxu0 0
          %481 = vmatpush1.bf16.msra.mxu0 0
          %482 = vmatprep.subr.bf16.mxu0 0
          %483 = vmatpush1.bf16.msra.mxu0 0
          %484 = vmatprep.mubr.bf16.mxu0 0
          %485 = vmatmul.mubr.bf16.gmra.mrb[0].mxu0 %v398
          %v486 = vpop.f32.mrb[0].mxu0
          %v487 = vadd.f32 0.0, %v486
          %v488 = vpop.f32.mrb[0].mxu0
          %v489 = vpop.f32.mrb[0].mxu0
          %v490 = vpop.f32.mrb[0].mxu0
          %491 = vdwg.mxu0
          %v496 = vunpack.c.l.b16 %v376
          %v497 = vunpack.c.l.b16 %v377
          %v498 = vunpack.c.l.b16 %v378
          %v499 = vunpack.c.l.b16 %v379
          %v500 = vpack.c.b16 %v497, %v496
          %v501 = vpack.c.b16 %v499, %v498
          %504 = vmatprep.subr.bf16.mxu0 0
          %505 = vmatpush1.bf16.msra.mxu0 %v500
          %506 = vmatprep.subr.bf16.mxu0 0
          %507 = vmatpush1.bf16.msra.mxu0 %v501
          %508 = vmatprep.subr.bf16.mxu0 0
          %509 = vmatpush1.bf16.msra.mxu0 0
          %510 = vmatprep.subr.bf16.mxu0 0
          %511 = vmatpush1.bf16.msra.mxu0 0
          %512 = vmatprep.subr.bf16.mxu0 0
          %513 = vmatpush1.bf16.msra.mxu0 0
          %514 = vmatprep.subr.bf16.mxu0 0
          %515 = vmatpush1.bf16.msra.mxu0 0
          %516 = vmatprep.subr.bf16.mxu0 0
          %517 = vmatpush1.bf16.msra.mxu0 0
          %518 = vmatprep.subr.bf16.mxu0 0
          %519 = vmatpush1.bf16.msra.mxu0 0
          %520 = vmatprep.subr.bf16.mxu0 0
          %521 = vmatpush1.bf16.msra.mxu0 0
          %522 = vmatprep.subr.bf16.mxu0 0
          %523 = vmatpush1.bf16.msra.mxu0 0
          %524 = vmatprep.subr.bf16.mxu0 0
          %525 = vmatpush1.bf16.msra.mxu0 0
          %526 = vmatprep.subr.bf16.mxu0 0
          %527 = vmatpush1.bf16.msra.mxu0 0
          %528 = vmatprep.subr.bf16.mxu0 0
          %529 = vmatpush1.bf16.msra.mxu0 0
          %530 = vmatprep.subr.bf16.mxu0 0
          %531 = vmatpush1.bf16.msra.mxu0 0
          %532 = vmatprep.subr.bf16.mxu0 0
          %533 = vmatpush1.bf16.msra.mxu0 0
          %534 = vmatprep.subr.bf16.mxu0 0
          %535 = vmatpush1.bf16.msra.mxu0 0
          %536 = vmatprep.mubr.bf16.mxu0 0
          %537 = vmatmul.mubr.bf16.gmra.mrb[0].mxu0 %v398
          %v538 = vpop.f32.mrb[0].mxu0
          %v539 = vadd.f32 0.0, %v538
          %v540 = vpop.f32.mrb[0].mxu0
          %v541 = vpop.f32.mrb[0].mxu0
          %v542 = vpop.f32.mrb[0].mxu0
          %543 = vdwg.mxu0
          %v548 = vunpack.c.l.b16 %v380
          %v549 = vunpack.c.l.b16 %v381
          %v550 = vunpack.c.l.b16 %v382
          %v551 = vunpack.c.l.b16 %v383
          %v552 = vpack.c.b16 %v549, %v548
          %v553 = vpack.c.b16 %v551, %v550
          %556 = vmatprep.subr.bf16.mxu0 0
          %557 = vmatpush1.bf16.msra.mxu0 %v552
          %558 = vmatprep.subr.bf16.mxu0 0
          %559 = vmatpush1.bf16.msra.mxu0 %v553
          %560 = vmatprep.subr.bf16.mxu0 0
          %561 = vmatpush1.bf16.msra.mxu0 0
          %562 = vmatprep.subr.bf16.mxu0 0
          %563 = vmatpush1.bf16.msra.mxu0 0
          %564 = vmatprep.subr.bf16.mxu0 0
          %565 = vmatpush1.bf16.msra.mxu0 0
          %566 = vmatprep.subr.bf16.mxu0 0
          %567 = vmatpush1.bf16.msra.mxu0 0
          %568 = vmatprep.subr.bf16.mxu0 0
          %569 = vmatpush1.bf16.msra.mxu0 0
          %570 = vmatprep.subr.bf16.mxu0 0
          %571 = vmatpush1.bf16.msra.mxu0 0
          %572 = vmatprep.subr.bf16.mxu0 0
          %573 = vmatpush1.bf16.msra.mxu0 0
          %574 = vmatprep.subr.bf16.mxu0 0
          %575 = vmatpush1.bf16.msra.mxu0 0
          %576 = vmatprep.subr.bf16.mxu0 0
          %577 = vmatpush1.bf16.msra.mxu0 0
          %578 = vmatprep.subr.bf16.mxu0 0
          %579 = vmatpush1.bf16.msra.mxu0 0
          %580 = vmatprep.subr.bf16.mxu0 0
          %581 = vmatpush1.bf16.msra.mxu0 0
          %582 = vmatprep.subr.bf16.mxu0 0
          %583 = vmatpush1.bf16.msra.mxu0 0
          %584 = vmatprep.subr.bf16.mxu0 0
          %585 = vmatpush1.bf16.msra.mxu0 0
          %586 = vmatprep.subr.bf16.mxu0 0
          %587 = vmatpush1.bf16.msra.mxu0 0
          %588 = vmatprep.mubr.bf16.mxu0 0
          %589 = vmatmul.mubr.bf16.gmra.mrb[0].mxu0 %v398
          %v590 = vpop.f32.mrb[0].mxu0
          %v591 = vadd.f32 0.0, %v590
          %v592 = vpop.f32.mrb[0].mxu0
          %v593 = vpop.f32.mrb[0].mxu0
          %v594 = vpop.f32.mrb[0].mxu0
          %595 = vdwg.mxu0
          %v596 = vpack.c.bf16 %v435, %v435
          %v597 = vpack.c.bf16 %v487, %v487
          %v598 = vpack.c.bf16 %v539, %v539
          %v599 = vpack.c.bf16 %v591, %v591
          %vm600 = vcmask 60416
          %601 = vst.msk [vmem:[#allocation2] sm:$0xf] %vm600, %v596
          %602 = vst.msk [vmem:[#allocation2 + $0x4] sm:$0xf] %vm600, %v597
          %603 = vst.msk [vmem:[#allocation2 + $0x8] sm:$0xf] %vm600, %v598
          %604 = vst.msk [vmem:[#allocation2 + $0xc] sm:$0xf] %vm600, %v599
          %vm605 = vcmask 7168
          %606 = vst.msk [vmem:[#allocation3] sm:$0xff] %vm605, -inf
          %607 = vst.msk [vmem:[#allocation3 + $0x8] sm:$0xff] %vm605, -inf
          %608 = vst.msk [vmem:[#allocation3 + $0x10] sm:$0xff] %vm605, -inf
          %609 = vst.msk [vmem:[#allocation3 + $0x18] sm:$0xff] %vm605, -inf
          %610 = vst.msk [vmem:[#allocation4] sm:$0xff] %vm605, 0.0
          %611 = vst.msk [vmem:[#allocation4 + $0x8] sm:$0xff] %vm605, 0.0
          %612 = vst.msk [vmem:[#allocation4 + $0x10] sm:$0xff] %vm605, 0.0
          %613 = vst.msk [vmem:[#allocation4 + $0x18] sm:$0xff] %vm605, 0.0
          %vm614 = vcmask 64512
          %615 = vst.msk [vmem:[#allocation5] sm:$0xff] %vm614, 0.0
          %616 = vst.msk [vmem:[#allocation5 + $0x8] sm:$0xff] %vm614, 0.0
          %617 = vst.msk [vmem:[#allocation5 + $0x10] sm:$0xff] %vm614, 0.0
          %618 = vst.msk [vmem:[#allocation5 + $0x18] sm:$0xff] %vm614, 0.0
        $region52: #{tpu_custom_call.1} parent=47 // pred_fallthru
          _
        %v619 = vld [vmem:[%s354] sm:$0xf]
        %v620 = vld [vmem:[%s361] sm:$0xf]
        %v621 = vld [vmem:[%s4] sm:$0xf]
        %v622 = vld [vmem:[%s4 + $0x4] sm:$0xf]
        %v623 = vld [vmem:[%s4 + $0x8] sm:$0xf]
        %v624 = vld [vmem:[%s4 + $0xc] sm:$0xf]
        %v625 = vld [vmem:[%s4 + $0x10] sm:$0xf]
        %v626 = vld [vmem:[%s4 + $0x14] sm:$0xf]
        %v627 = vld [vmem:[%s4 + $0x18] sm:$0xf]
        %v628 = vld [vmem:[%s4 + $0x1c] sm:$0xf]
        %v629 = vld [vmem:[%s4 + $0x20] sm:$0xf]
        %v630 = vld [vmem:[%s4 + $0x24] sm:$0xf]
        %v631 = vld [vmem:[%s4 + $0x28] sm:$0xf]
        %v632 = vld [vmem:[%s4 + $0x2c] sm:$0xf]
        %v633 = vld [vmem:[%s4 + $0x30] sm:$0xf]
        %v634 = vld [vmem:[%s4 + $0x34] sm:$0xf]
        %v635 = vld [vmem:[%s4 + $0x38] sm:$0xf]
        %v636 = vld [vmem:[%s4 + $0x3c] sm:$0xf]
        %v641 = vunpack.c.l.b16 %v621
        %v642 = vunpack.c.l.b16 %v622
        %v643 = vunpack.c.l.b16 %v623
        %v644 = vunpack.c.l.b16 %v624
        %v645 = vpack.c.b16 %v642, %v641
        %v646 = vpack.c.b16 %v644, %v643
        %vm649 = vcmask 261120
        %v651 = vsel %vm649, %v619, 0
        %653 = vmatprep.subr.bf16.mxu0 0
        %654 = vmatpush1.bf16.msra.mxu0 %v645
        %655 = vmatprep.subr.bf16.mxu0 0
        %656 = vmatpush1.bf16.msra.mxu0 %v646
        %657 = vmatprep.subr.bf16.mxu0 0
        %658 = vmatpush1.bf16.msra.mxu0 0
        %659 = vmatprep.subr.bf16.mxu0 0
        %660 = vmatpush1.bf16.msra.mxu0 0
        %661 = vmatprep.subr.bf16.mxu0 0
        %662 = vmatpush1.bf16.msra.mxu0 0
        %663 = vmatprep.subr.bf16.mxu0 0
        %664 = vmatpush1.bf16.msra.mxu0 0
        %665 = vmatprep.subr.bf16.mxu0 0
        %666 = vmatpush1.bf16.msra.mxu0 0
        %667 = vmatprep.subr.bf16.mxu0 0
        %668 = vmatpush1.bf16.msra.mxu0 0
        %669 = vmatprep.subr.bf16.mxu0 0
        %670 = vmatpush1.bf16.msra.mxu0 0
        %671 = vmatprep.subr.bf16.mxu0 0
        %672 = vmatpush1.bf16.msra.mxu0 0
        %673 = vmatprep.subr.bf16.mxu0 0
        %674 = vmatpush1.bf16.msra.mxu0 0
        %675 = vmatprep.subr.bf16.mxu0 0
        %676 = vmatpush1.bf16.msra.mxu0 0
        %677 = vmatprep.subr.bf16.mxu0 0
        %678 = vmatpush1.bf16.msra.mxu0 0
        %679 = vmatprep.subr.bf16.mxu0 0
        %680 = vmatpush1.bf16.msra.mxu0 0
        %681 = vmatprep.subr.bf16.mxu0 0
        %682 = vmatpush1.bf16.msra.mxu0 0
        %683 = vmatprep.subr.bf16.mxu0 0
        %684 = vmatpush1.bf16.msra.mxu0 0
        %685 = vmatprep.mubr.bf16.mxu0 0
        %686 = vmatmul.mubr.bf16.gmra.mrb[0].mxu0 %v651
        %v687 = vpop.f32.mrb[0].mxu0
        %v688 = vadd.f32 0.0, %v687
        %v689 = vpop.f32.mrb[0].mxu0
        %v690 = vpop.f32.mrb[0].mxu0
        %v691 = vpop.f32.mrb[0].mxu0
        %692 = vdwg.mxu0
        %v697 = vunpack.c.l.b16 %v625
        %v698 = vunpack.c.l.b16 %v626
        %v699 = vunpack.c.l.b16 %v627
        %v700 = vunpack.c.l.b16 %v628
        %v701 = vpack.c.b16 %v698, %v697
        %v702 = vpack.c.b16 %v700, %v699
        %705 = vmatprep.subr.bf16.mxu0 0
        %706 = vmatpush1.bf16.msra.mxu0 %v701
        %707 = vmatprep.subr.bf16.mxu0 0
        %708 = vmatpush1.bf16.msra.mxu0 %v702
        %709 = vmatprep.subr.bf16.mxu0 0
        %710 = vmatpush1.bf16.msra.mxu0 0
        %711 = vmatprep.subr.bf16.mxu0 0
        %712 = vmatpush1.bf16.msra.mxu0 0
        %713 = vmatprep.subr.bf16.mxu0 0
        %714 = vmatpush1.bf16.msra.mxu0 0
        %715 = vmatprep.subr.bf16.mxu0 0
        %716 = vmatpush1.bf16.msra.mxu0 0
        %717 = vmatprep.subr.bf16.mxu0 0
        %718 = vmatpush1.bf16.msra.mxu0 0
        %719 = vmatprep.subr.bf16.mxu0 0
        %720 = vmatpush1.bf16.msra.mxu0 0
        %721 = vmatprep.subr.bf16.mxu0 0
        %722 = vmatpush1.bf16.msra.mxu0 0
        %723 = vmatprep.subr.bf16.mxu0 0
        %724 = vmatpush1.bf16.msra.mxu0 0
        %725 = vmatprep.subr.bf16.mxu0 0
        %726 = vmatpush1.bf16.msra.mxu0 0
        %727 = vmatprep.subr.bf16.mxu0 0
        %728 = vmatpush1.bf16.msra.mxu0 0
        %729 = vmatprep.subr.bf16.mxu0 0
        %730 = vmatpush1.bf16.msra.mxu0 0
        %731 = vmatprep.subr.bf16.mxu0 0
        %732 = vmatpush1.bf16.msra.mxu0 0
        %733 = vmatprep.subr.bf16.mxu0 0
        %734 = vmatpush1.bf16.msra.mxu0 0
        %735 = vmatprep.subr.bf16.mxu0 0
        %736 = vmatpush1.bf16.msra.mxu0 0
        %737 = vmatprep.mubr.bf16.mxu0 0
        %738 = vmatmul.mubr.bf16.gmra.mrb[0].mxu0 %v651
        %v739 = vpop.f32.mrb[0].mxu0
        %v740 = vadd.f32 0.0, %v739
        %v741 = vpop.f32.mrb[0].mxu0
        %v742 = vpop.f32.mrb[0].mxu0
        %v743 = vpop.f32.mrb[0].mxu0
        %744 = vdwg.mxu0
        %v749 = vunpack.c.l.b16 %v629
        %v750 = vunpack.c.l.b16 %v630
        %v751 = vunpack.c.l.b16 %v631
        %v752 = vunpack.c.l.b16 %v632
        %v753 = vpack.c.b16 %v750, %v749
        %v754 = vpack.c.b16 %v752, %v751
        %757 = vmatprep.subr.bf16.mxu0 0
        %758 = vmatpush1.bf16.msra.mxu0 %v753
        %759 = vmatprep.subr.bf16.mxu0 0
        %760 = vmatpush1.bf16.msra.mxu0 %v754
        %761 = vmatprep.subr.bf16.mxu0 0
        %762 = vmatpush1.bf16.msra.mxu0 0
        %763 = vmatprep.subr.bf16.mxu0 0
        %764 = vmatpush1.bf16.msra.mxu0 0
        %765 = vmatprep.subr.bf16.mxu0 0
        %766 = vmatpush1.bf16.msra.mxu0 0
        %767 = vmatprep.subr.bf16.mxu0 0
        %768 = vmatpush1.bf16.msra.mxu0 0
        %769 = vmatprep.subr.bf16.mxu0 0
        %770 = vmatpush1.bf16.msra.mxu0 0
        %771 = vmatprep.subr.bf16.mxu0 0
        %772 = vmatpush1.bf16.msra.mxu0 0
        %773 = vmatprep.subr.bf16.mxu0 0
        %774 = vmatpush1.bf16.msra.mxu0 0
        %775 = vmatprep.subr.bf16.mxu0 0
        %776 = vmatpush1.bf16.msra.mxu0 0
        %777 = vmatprep.subr.bf16.mxu0 0
        %778 = vmatpush1.bf16.msra.mxu0 0
        %779 = vmatprep.subr.bf16.mxu0 0
        %780 = vmatpush1.bf16.msra.mxu0 0
        %781 = vmatprep.subr.bf16.mxu0 0
        %782 = vmatpush1.bf16.msra.mxu0 0
        %783 = vmatprep.subr.bf16.mxu0 0
        %784 = vmatpush1.bf16.msra.mxu0 0
        %785 = vmatprep.subr.bf16.mxu0 0
        %786 = vmatpush1.bf16.msra.mxu0 0
        %787 = vmatprep.subr.bf16.mxu0 0
        %788 = vmatpush1.bf16.msra.mxu0 0
        %789 = vmatprep.mubr.bf16.mxu0 0
        %790 = vmatmul.mubr.bf16.gmra.mrb[0].mxu0 %v651
        %v791 = vpop.f32.mrb[0].mxu0
        %v792 = vadd.f32 0.0, %v791
        %v793 = vpop.f32.mrb[0].mxu0
        %v794 = vpop.f32.mrb[0].mxu0
        %v795 = vpop.f32.mrb[0].mxu0
        %796 = vdwg.mxu0
        %v801 = vunpack.c.l.b16 %v633
        %v802 = vunpack.c.l.b16 %v634
        %v803 = vunpack.c.l.b16 %v635
        %v804 = vunpack.c.l.b16 %v636
        %v805 = vpack.c.b16 %v802, %v801
        %v806 = vpack.c.b16 %v804, %v803
        %809 = vmatprep.subr.bf16.mxu0 0
        %810 = vmatpush1.bf16.msra.mxu0 %v805
        %811 = vmatprep.subr.bf16.mxu0 0
        %812 = vmatpush1.bf16.msra.mxu0 %v806
        %813 = vmatprep.subr.bf16.mxu0 0
        %814 = vmatpush1.bf16.msra.mxu0 0
        %815 = vmatprep.subr.bf16.mxu0 0
        %816 = vmatpush1.bf16.msra.mxu0 0
        %817 = vmatprep.subr.bf16.mxu0 0
        %818 = vmatpush1.bf16.msra.mxu0 0
        %819 = vmatprep.subr.bf16.mxu0 0
        %820 = vmatpush1.bf16.msra.mxu0 0
        %821 = vmatprep.subr.bf16.mxu0 0
        %822 = vmatpush1.bf16.msra.mxu0 0
        %823 = vmatprep.subr.bf16.mxu0 0
        %824 = vmatpush1.bf16.msra.mxu0 0
        %825 = vmatprep.subr.bf16.mxu0 0
        %826 = vmatpush1.bf16.msra.mxu0 0
        %827 = vmatprep.subr.bf16.mxu0 0
        %828 = vmatpush1.bf16.msra.mxu0 0
        %829 = vmatprep.subr.bf16.mxu0 0
        %830 = vmatpush1.bf16.msra.mxu0 0
        %831 = vmatprep.subr.bf16.mxu0 0
        %832 = vmatpush1.bf16.msra.mxu0 0
        %833 = vmatprep.subr.bf16.mxu0 0
        %834 = vmatpush1.bf16.msra.mxu0 0
        %835 = vmatprep.subr.bf16.mxu0 0
        %836 = vmatpush1.bf16.msra.mxu0 0
        %837 = vmatprep.subr.bf16.mxu0 0
        %838 = vmatpush1.bf16.msra.mxu0 0
        %839 = vmatprep.subr.bf16.mxu0 0
        %840 = vmatpush1.bf16.msra.mxu0 0
        %841 = vmatprep.mubr.bf16.mxu0 0
        %842 = vmatmul.mubr.bf16.gmra.mrb[0].mxu0 %v651
        %v843 = vpop.f32.mrb[0].mxu0
        %v844 = vadd.f32 0.0, %v843
        %v845 = vpop.f32.mrb[0].mxu0
        %v846 = vpop.f32.mrb[0].mxu0
        %v847 = vpop.f32.mrb[0].mxu0
        %848 = vdwg.mxu0
        %v849 = vpack.c.bf16 %v688, %v688
        %v850 = vpack.c.bf16 %v740, %v740
        %v851 = vpack.c.bf16 %v792, %v792
        %v852 = vpack.c.bf16 %v844, %v844
        %v853 = vld [vmem:[%s5] sm:$0xf]
        %v854 = vld [vmem:[%s5 + $0x4] sm:$0xf]
        %v855 = vld [vmem:[%s5 + $0x8] sm:$0xf]
        %v856 = vld [vmem:[%s5 + $0xc] sm:$0xf]
        %v857 = vld [vmem:[%s5 + $0x10] sm:$0xf]
        %v858 = vld [vmem:[%s5 + $0x14] sm:$0xf]
        %v859 = vld [vmem:[%s5 + $0x18] sm:$0xf]
        %v860 = vld [vmem:[%s5 + $0x1c] sm:$0xf]
        %v861 = vld [vmem:[%s5 + $0x20] sm:$0xf]
        %v862 = vld [vmem:[%s5 + $0x24] sm:$0xf]
        %v863 = vld [vmem:[%s5 + $0x28] sm:$0xf]
        %v864 = vld [vmem:[%s5 + $0x2c] sm:$0xf]
        %v865 = vld [vmem:[%s5 + $0x30] sm:$0xf]
        %v866 = vld [vmem:[%s5 + $0x34] sm:$0xf]
        %v867 = vld [vmem:[%s5 + $0x38] sm:$0xf]
        %v868 = vld [vmem:[%s5 + $0x3c] sm:$0xf]
        %v873 = vunpack.c.l.b16 %v853
        %v874 = vunpack.c.l.b16 %v854
        %v875 = vunpack.c.l.b16 %v855
        %v876 = vunpack.c.l.b16 %v856
        %v877 = vpack.c.b16 %v874, %v873
        %v878 = vpack.c.b16 %v876, %v875
        %v882 = vsel %vm649, %v620, 0
        %884 = vmatprep.subr.bf16.mxu0 0
        %885 = vmatpush1.bf16.msra.mxu0 %v877
        %886 = vmatprep.subr.bf16.mxu0 0
        %887 = vmatpush1.bf16.msra.mxu0 %v878
        %888 = vmatprep.subr.bf16.mxu0 0
        %889 = vmatpush1.bf16.msra.mxu0 0
        %890 = vmatprep.subr.bf16.mxu0 0
        %891 = vmatpush1.bf16.msra.mxu0 0
        %892 = vmatprep.subr.bf16.mxu0 0
        %893 = vmatpush1.bf16.msra.mxu0 0
        %894 = vmatprep.subr.bf16.mxu0 0
        %895 = vmatpush1.bf16.msra.mxu0 0
        %896 = vmatprep.subr.bf16.mxu0 0
        %897 = vmatpush1.bf16.msra.mxu0 0
        %898 = vmatprep.subr.bf16.mxu0 0
        %899 = vmatpush1.bf16.msra.mxu0 0
        %900 = vmatprep.subr.bf16.mxu0 0
        %901 = vmatpush1.bf16.msra.mxu0 0
        %902 = vmatprep.subr.bf16.mxu0 0
        %903 = vmatpush1.bf16.msra.mxu0 0
        %904 = vmatprep.subr.bf16.mxu0 0
        %905 = vmatpush1.bf16.msra.mxu0 0
        %906 = vmatprep.subr.bf16.mxu0 0
        %907 = vmatpush1.bf16.msra.mxu0 0
        %908 = vmatprep.subr.bf16.mxu0 0
        %909 = vmatpush1.bf16.msra.mxu0 0
        %910 = vmatprep.subr.bf16.mxu0 0
        %911 = vmatpush1.bf16.msra.mxu0 0
        %912 = vmatprep.subr.bf16.mxu0 0
        %913 = vmatpush1.bf16.msra.mxu0 0
        %914 = vmatprep.subr.bf16.mxu0 0
        %915 = vmatpush1.bf16.msra.mxu0 0
        %916 = vmatprep.mubr.bf16.mxu0 0
        %917 = vmatmul.mubr.bf16.gmra.mrb[0].mxu0 %v882
        %v918 = vpop.f32.mrb[0].mxu0
        %v919 = vadd.f32 0.0, %v918
        %v920 = vpop.f32.mrb[0].mxu0
        %v921 = vpop.f32.mrb[0].mxu0
        %v922 = vpop.f32.mrb[0].mxu0
        %923 = vdwg.mxu0
        %v928 = vunpack.c.l.b16 %v857
        %v929 = vunpack.c.l.b16 %v858
        %v930 = vunpack.c.l.b16 %v859
        %v931 = vunpack.c.l.b16 %v860
        %v932 = vpack.c.b16 %v929, %v928
        %v933 = vpack.c.b16 %v931, %v930
        %936 = vmatprep.subr.bf16.mxu0 0
        %937 = vmatpush1.bf16.msra.mxu0 %v932
        %938 = vmatprep.subr.bf16.mxu0 0
        %939 = vmatpush1.bf16.msra.mxu0 %v933
        %940 = vmatprep.subr.bf16.mxu0 0
        %941 = vmatpush1.bf16.msra.mxu0 0
        %942 = vmatprep.subr.bf16.mxu0 0
        %943 = vmatpush1.bf16.msra.mxu0 0
        %944 = vmatprep.subr.bf16.mxu0 0
        %945 = vmatpush1.bf16.msra.mxu0 0
        %946 = vmatprep.subr.bf16.mxu0 0
        %947 = vmatpush1.bf16.msra.mxu0 0
        %948 = vmatprep.subr.bf16.mxu0 0
        %949 = vmatpush1.bf16.msra.mxu0 0
        %950 = vmatprep.subr.bf16.mxu0 0
        %951 = vmatpush1.bf16.msra.mxu0 0
        %952 = vmatprep.subr.bf16.mxu0 0
        %953 = vmatpush1.bf16.msra.mxu0 0
        %954 = vmatprep.subr.bf16.mxu0 0
        %955 = vmatpush1.bf16.msra.mxu0 0
        %956 = vmatprep.subr.bf16.mxu0 0
        %957 = vmatpush1.bf16.msra.mxu0 0
        %958 = vmatprep.subr.bf16.mxu0 0
        %959 = vmatpush1.bf16.msra.mxu0 0
        %960 = vmatprep.subr.bf16.mxu0 0
        %961 = vmatpush1.bf16.msra.mxu0 0
        %962 = vmatprep.subr.bf16.mxu0 0
        %963 = vmatpush1.bf16.msra.mxu0 0
        %964 = vmatprep.subr.bf16.mxu0 0
        %965 = vmatpush1.bf16.msra.mxu0 0
        %966 = vmatprep.subr.bf16.mxu0 0
        %967 = vmatpush1.bf16.msra.mxu0 0
        %968 = vmatprep.mubr.bf16.mxu0 0
        %969 = vmatmul.mubr.bf16.gmra.mrb[0].mxu0 %v882
        %v970 = vpop.f32.mrb[0].mxu0
        %v971 = vadd.f32 0.0, %v970
        %v972 = vpop.f32.mrb[0].mxu0
        %v973 = vpop.f32.mrb[0].mxu0
        %v974 = vpop.f32.mrb[0].mxu0
        %975 = vdwg.mxu0
        %v980 = vunpack.c.l.b16 %v861
        %v981 = vunpack.c.l.b16 %v862
        %v982 = vunpack.c.l.b16 %v863
        %v983 = vunpack.c.l.b16 %v864
        %v984 = vpack.c.b16 %v981, %v980
        %v985 = vpack.c.b16 %v983, %v982
        %988 = vmatprep.subr.bf16.mxu0 0
        %989 = vmatpush1.bf16.msra.mxu0 %v984
        %990 = vmatprep.subr.bf16.mxu0 0
        %991 = vmatpush1.bf16.msra.mxu0 %v985
        %992 = vmatprep.subr.bf16.mxu0 0
        %993 = vmatpush1.bf16.msra.mxu0 0
        %994 = vmatprep.subr.bf16.mxu0 0
        %995 = vmatpush1.bf16.msra.mxu0 0
        %996 = vmatprep.subr.bf16.mxu0 0
        %997 = vmatpush1.bf16.msra.mxu0 0
        %998 = vmatprep.subr.bf16.mxu0 0
        %999 = vmatpush1.bf16.msra.mxu0 0
        %1000 = vmatprep.subr.bf16.mxu0 0
        %1001 = vmatpush1.bf16.msra.mxu0 0
        %1002 = vmatprep.subr.bf16.mxu0 0
        %1003 = vmatpush1.bf16.msra.mxu0 0
        %1004 = vmatprep.subr.bf16.mxu0 0
        %1005 = vmatpush1.bf16.msra.mxu0 0
        %1006 = vmatprep.subr.bf16.mxu0 0
        %1007 = vmatpush1.bf16.msra.mxu0 0
        %1008 = vmatprep.subr.bf16.mxu0 0
        %1009 = vmatpush1.bf16.msra.mxu0 0
        %1010 = vmatprep.subr.bf16.mxu0 0
        %1011 = vmatpush1.bf16.msra.mxu0 0
        %1012 = vmatprep.subr.bf16.mxu0 0
        %1013 = vmatpush1.bf16.msra.mxu0 0
        %1014 = vmatprep.subr.bf16.mxu0 0
        %1015 = vmatpush1.bf16.msra.mxu0 0
        %1016 = vmatprep.subr.bf16.mxu0 0
        %1017 = vmatpush1.bf16.msra.mxu0 0
        %1018 = vmatprep.subr.bf16.mxu0 0
        %1019 = vmatpush1.bf16.msra.mxu0 0
        %1020 = vmatprep.mubr.bf16.mxu0 0
        %1021 = vmatmul.mubr.bf16.gmra.mrb[0].mxu0 %v882
        %v1022 = vpop.f32.mrb[0].mxu0
        %v1023 = vadd.f32 0.0, %v1022
        %v1024 = vpop.f32.mrb[0].mxu0
        %v1025 = vpop.f32.mrb[0].mxu0
        %v1026 = vpop.f32.mrb[0].mxu0
        %1027 = vdwg.mxu0
        %v1032 = vunpack.c.l.b16 %v865
        %v1033 = vunpack.c.l.b16 %v866
        %v1034 = vunpack.c.l.b16 %v867
        %v1035 = vunpack.c.l.b16 %v868
        %v1036 = vpack.c.b16 %v1033, %v1032
        %v1037 = vpack.c.b16 %v1035, %v1034
        %1040 = vmatprep.subr.bf16.mxu0 0
        %1041 = vmatpush1.bf16.msra.mxu0 %v1036
        %1042 = vmatprep.subr.bf16.mxu0 0
        %1043 = vmatpush1.bf16.msra.mxu0 %v1037
        %1044 = vmatprep.subr.bf16.mxu0 0
        %1045 = vmatpush1.bf16.msra.mxu0 0
        %1046 = vmatprep.subr.bf16.mxu0 0
        %1047 = vmatpush1.bf16.msra.mxu0 0
        %1048 = vmatprep.subr.bf16.mxu0 0
        %1049 = vmatpush1.bf16.msra.mxu0 0
        %1050 = vmatprep.subr.bf16.mxu0 0
        %1051 = vmatpush1.bf16.msra.mxu0 0
        %1052 = vmatprep.subr.bf16.mxu0 0
        %1053 = vmatpush1.bf16.msra.mxu0 0
        %1054 = vmatprep.subr.bf16.mxu0 0
        %1055 = vmatpush1.bf16.msra.mxu0 0
        %1056 = vmatprep.subr.bf16.mxu0 0
        %1057 = vmatpush1.bf16.msra.mxu0 0
        %1058 = vmatprep.subr.bf16.mxu0 0
        %1059 = vmatpush1.bf16.msra.mxu0 0
        %1060 = vmatprep.subr.bf16.mxu0 0
        %1061 = vmatpush1.bf16.msra.mxu0 0
        %1062 = vmatprep.subr.bf16.mxu0 0
        %1063 = vmatpush1.bf16.msra.mxu0 0
        %1064 = vmatprep.subr.bf16.mxu0 0
        %1065 = vmatpush1.bf16.msra.mxu0 0
        %1066 = vmatprep.subr.bf16.mxu0 0
        %1067 = vmatpush1.bf16.msra.mxu0 0
        %1068 = vmatprep.subr.bf16.mxu0 0
        %1069 = vmatpush1.bf16.msra.mxu0 0
        %1070 = vmatprep.subr.bf16.mxu0 0
        %1071 = vmatpush1.bf16.msra.mxu0 0
        %1072 = vmatprep.mubr.bf16.mxu0 0
        %1073 = vmatmul.mubr.bf16.gmra.mrb[0].mxu0 %v882
        %v1074 = vpop.f32.mrb[0].mxu0
        %v1075 = vadd.f32 0.0, %v1074
        %v1076 = vpop.f32.mrb[0].mxu0
        %v1077 = vpop.f32.mrb[0].mxu0
        %v1078 = vpop.f32.mrb[0].mxu0
        %1079 = vdwg.mxu0
        %v1080 = vpack.c.bf16 %v919, %v919
        %v1081 = vpack.c.bf16 %v971, %v971
        %v1082 = vpack.c.bf16 %v1023, %v1023
        %v1083 = vpack.c.bf16 %v1075, %v1075
        %v1084 = vld [vmem:[#allocation2] sm:$0xf]
        %v1085 = vld [vmem:[#allocation2 + $0x4] sm:$0xf]
        %v1086 = vld [vmem:[#allocation2 + $0x8] sm:$0xf]
        %v1087 = vld [vmem:[#allocation2 + $0xc] sm:$0xf]
        %vm1088 = vcmask 64512
        %v1090 = vsel %vm1088, %v1084, 0
        %v1093 = vsel %vm1088, %v849, 0
        %1095 = vmatprep.subr.bf16.mxu0 0
        %1096 = vmatpush1.bf16.xpose.msra.mxu0 %v1093
        %1097 = vmatprep.subr.bf16.mxu0 0
        %1098 = vmatpush1.bf16.xpose.msra.mxu0 0
        %1099 = vmatprep.subr.bf16.mxu0 0
        %1100 = vmatpush1.bf16.xpose.msra.mxu0 0
        %1101 = vmatprep.subr.bf16.mxu0 0
        %1102 = vmatpush1.bf16.xpose.msra.mxu0 0
        %1103 = vmatprep.subr.bf16.mxu0 0
        %1104 = vmatpush1.bf16.xpose.msra.mxu0 0
        %1105 = vmatprep.subr.bf16.mxu0 0
        %1106 = vmatpush1.bf16.xpose.msra.mxu0 0
        %1107 = vmatprep.subr.bf16.mxu0 0
        %1108 = vmatpush1.bf16.xpose.msra.mxu0 0
        %1109 = vmatprep.subr.bf16.mxu0 0
        %1110 = vmatpush1.bf16.xpose.msra.mxu0 0
        %1111 = vmatprep.subr.bf16.mxu0 0
        %1112 = vmatpush1.bf16.xpose.msra.mxu0 0
        %1113 = vmatprep.subr.bf16.mxu0 0
        %1114 = vmatpush1.bf16.xpose.msra.mxu0 0
        %1115 = vmatprep.subr.bf16.mxu0 0
        %1116 = vmatpush1.bf16.xpose.msra.mxu0 0
        %1117 = vmatprep.subr.bf16.mxu0 0
        %1118 = vmatpush1.bf16.xpose.msra.mxu0 0
        %1119 = vmatprep.subr.bf16.mxu0 0
        %1120 = vmatpush1.bf16.xpose.msra.mxu0 0
        %1121 = vmatprep.subr.bf16.mxu0 0
        %1122 = vmatpush1.bf16.xpose.msra.mxu0 0
        %1123 = vmatprep.subr.bf16.mxu0 0
        %1124 = vmatpush1.bf16.xpose.msra.mxu0 0
        %1125 = vmatprep.subr.bf16.mxu0 0
        %1126 = vmatpush1.bf16.xpose.msra.mxu0 0
        %1127 = vmatprep.mubr.bf16.mxu0 0
        %1128 = vmatmul.mubr.bf16.gmra.mrb[0].mxu0 %v1090
        %v1129 = vpop.f32.mrb[0].mxu0
        %v1130 = vadd.f32 0.0, %v1129
        %v1131 = vpop.f32.mrb[0].mxu0
        %v1132 = vpop.f32.mrb[0].mxu0
        %v1133 = vpop.f32.mrb[0].mxu0
        %1134 = vdwg.mxu0
        %v1136 = vsel %vm1088, %v1085, 0
        %v1139 = vsel %vm1088, %v850, 0
        %1141 = vmatprep.subr.bf16.mxu0 0
        %1142 = vmatpush1.bf16.xpose.msra.mxu0 %v1139
        %1143 = vmatprep.subr.bf16.mxu0 0
        %1144 = vmatpush1.bf16.xpose.msra.mxu0 0
        %1145 = vmatprep.subr.bf16.mxu0 0
        %1146 = vmatpush1.bf16.xpose.msra.mxu0 0
        %1147 = vmatprep.subr.bf16.mxu0 0
        %1148 = vmatpush1.bf16.xpose.msra.mxu0 0
        %1149 = vmatprep.subr.bf16.mxu0 0
        %1150 = vmatpush1.bf16.xpose.msra.mxu0 0
        %1151 = vmatprep.subr.bf16.mxu0 0
        %1152 = vmatpush1.bf16.xpose.msra.mxu0 0
        %1153 = vmatprep.subr.bf16.mxu0 0
        %1154 = vmatpush1.bf16.xpose.msra.mxu0 0
        %1155 = vmatprep.subr.bf16.mxu0 0
        %1156 = vmatpush1.bf16.xpose.msra.mxu0 0
        %1157 = vmatprep.subr.bf16.mxu0 0
        %1158 = vmatpush1.bf16.xpose.msra.mxu0 0
        %1159 = vmatprep.subr.bf16.mxu0 0
        %1160 = vmatpush1.bf16.xpose.msra.mxu0 0
        %1161 = vmatprep.subr.bf16.mxu0 0
        %1162 = vmatpush1.bf16.xpose.msra.mxu0 0
        %1163 = vmatprep.subr.bf16.mxu0 0
        %1164 = vmatpush1.bf16.xpose.msra.mxu0 0
        %1165 = vmatprep.subr.bf16.mxu0 0
        %1166 = vmatpush1.bf16.xpose.msra.mxu0 0
        %1167 = vmatprep.subr.bf16.mxu0 0
        %1168 = vmatpush1.bf16.xpose.msra.mxu0 0
        %1169 = vmatprep.subr.bf16.mxu0 0
        %1170 = vmatpush1.bf16.xpose.msra.mxu0 0
        %1171 = vmatprep.subr.bf16.mxu0 0
        %1172 = vmatpush1.bf16.xpose.msra.mxu0 0
        %1173 = vmatprep.mubr.bf16.mxu0 0
        %1174 = vmatmul.mubr.bf16.gmra.mrb[0].mxu0 %v1136
        %v1175 = vpop.f32.mrb[0].mxu0
        %v1176 = vadd.f32 0.0, %v1175
        %v1177 = vpop.f32.mrb[0].mxu0
        %v1178 = vpop.f32.mrb[0].mxu0
        %v1179 = vpop.f32.mrb[0].mxu0
        %1180 = vdwg.mxu0
        %v1182 = vsel %vm1088, %v1086, 0
        %v1185 = vsel %vm1088, %v851, 0
        %1187 = vmatprep.subr.bf16.mxu0 0
        %1188 = vmatpush1.bf16.xpose.msra.mxu0 %v1185
        %1189 = vmatprep.subr.bf16.mxu0 0
        %1190 = vmatpush1.bf16.xpose.msra.mxu0 0
        %1191 = vmatprep.subr.bf16.mxu0 0
        %1192 = vmatpush1.bf16.xpose.msra.mxu0 0
        %1193 = vmatprep.subr.bf16.mxu0 0
        %1194 = vmatpush1.bf16.xpose.msra.mxu0 0
        %1195 = vmatprep.subr.bf16.mxu0 0
        %1196 = vmatpush1.bf16.xpose.msra.mxu0 0
        %1197 = vmatprep.subr.bf16.mxu0 0
        %1198 = vmatpush1.bf16.xpose.msra.mxu0 0
        %1199 = vmatprep.subr.bf16.mxu0 0
        %1200 = vmatpush1.bf16.xpose.msra.mxu0 0
        %1201 = vmatprep.subr.bf16.mxu0 0
        %1202 = vmatpush1.bf16.xpose.msra.mxu0 0
        %1203 = vmatprep.subr.bf16.mxu0 0
        %1204 = vmatpush1.bf16.xpose.msra.mxu0 0
        %1205 = vmatprep.subr.bf16.mxu0 0
        %1206 = vmatpush1.bf16.xpose.msra.mxu0 0
        %1207 = vmatprep.subr.bf16.mxu0 0
        %1208 = vmatpush1.bf16.xpose.msra.mxu0 0
        %1209 = vmatprep.subr.bf16.mxu0 0
        %1210 = vmatpush1.bf16.xpose.msra.mxu0 0
        %1211 = vmatprep.subr.bf16.mxu0 0
        %1212 = vmatpush1.bf16.xpose.msra.mxu0 0
        %1213 = vmatprep.subr.bf16.mxu0 0
        %1214 = vmatpush1.bf16.xpose.msra.mxu0 0
        %1215 = vmatprep.subr.bf16.mxu0 0
        %1216 = vmatpush1.bf16.xpose.msra.mxu0 0
        %1217 = vmatprep.subr.bf16.mxu0 0
        %1218 = vmatpush1.bf16.xpose.msra.mxu0 0
        %1219 = vmatprep.mubr.bf16.mxu0 0
        %1220 = vmatmul.mubr.bf16.gmra.mrb[0].mxu0 %v1182
        %v1221 = vpop.f32.mrb[0].mxu0
        %v1222 = vadd.f32 0.0, %v1221
        %v1223 = vpop.f32.mrb[0].mxu0
        %v1224 = vpop.f32.mrb[0].mxu0
        %v1225 = vpop.f32.mrb[0].mxu0
        %1226 = vdwg.mxu0
        %v1228 = vsel %vm1088, %v1087, 0
        %v1231 = vsel %vm1088, %v852, 0
        %1233 = vmatprep.subr.bf16.mxu0 0
        %1234 = vmatpush1.bf16.xpose.msra.mxu0 %v1231
        %1235 = vmatprep.subr.bf16.mxu0 0
        %1236 = vmatpush1.bf16.xpose.msra.mxu0 0
        %1237 = vmatprep.subr.bf16.mxu0 0
        %1238 = vmatpush1.bf16.xpose.msra.mxu0 0
        %1239 = vmatprep.subr.bf16.mxu0 0
        %1240 = vmatpush1.bf16.xpose.msra.mxu0 0
        %1241 = vmatprep.subr.bf16.mxu0 0
        %1242 = vmatpush1.bf16.xpose.msra.mxu0 0
        %1243 = vmatprep.subr.bf16.mxu0 0
        %1244 = vmatpush1.bf16.xpose.msra.mxu0 0
        %1245 = vmatprep.subr.bf16.mxu0 0
        %1246 = vmatpush1.bf16.xpose.msra.mxu0 0
        %1247 = vmatprep.subr.bf16.mxu0 0
        %1248 = vmatpush1.bf16.xpose.msra.mxu0 0
        %1249 = vmatprep.subr.bf16.mxu0 0
        %1250 = vmatpush1.bf16.xpose.msra.mxu0 0
        %1251 = vmatprep.subr.bf16.mxu0 0
        %1252 = vmatpush1.bf16.xpose.msra.mxu0 0
        %1253 = vmatprep.subr.bf16.mxu0 0
        %1254 = vmatpush1.bf16.xpose.msra.mxu0 0
        %1255 = vmatprep.subr.bf16.mxu0 0
        %1256 = vmatpush1.bf16.xpose.msra.mxu0 0
        %1257 = vmatprep.subr.bf16.mxu0 0
        %1258 = vmatpush1.bf16.xpose.msra.mxu0 0
        %1259 = vmatprep.subr.bf16.mxu0 0
        %1260 = vmatpush1.bf16.xpose.msra.mxu0 0
        %1261 = vmatprep.subr.bf16.mxu0 0
        %1262 = vmatpush1.bf16.xpose.msra.mxu0 0
        %1263 = vmatprep.subr.bf16.mxu0 0
        %1264 = vmatpush1.bf16.xpose.msra.mxu0 0
        %1265 = vmatprep.mubr.bf16.mxu0 0
        %1266 = vmatmul.mubr.bf16.gmra.mrb[0].mxu0 %v1228
        %v1267 = vpop.f32.mrb[0].mxu0
        %v1268 = vadd.f32 0.0, %v1267
        %v1269 = vpop.f32.mrb[0].mxu0
        %v1270 = vpop.f32.mrb[0].mxu0
        %v1271 = vpop.f32.mrb[0].mxu0
        %1272 = vdwg.mxu0
        %v1273 = vld [vmem:[#allocation3] sm:$0xff]
        %v1274 = vld [vmem:[#allocation3 + $0x8] sm:$0xff]
        %v1275 = vld [vmem:[#allocation3 + $0x10] sm:$0xff]
        %v1276 = vld [vmem:[#allocation3 + $0x18] sm:$0xff]
        %v1277 = vsel %vm1088, %v1130, -inf
        %1278 = vmax.xlane.f32.xlu0 %v1277
        %v1279 = vpop.xlane.xlu0 %1278
        %v1280 = vsel %vm1088, %v1176, -inf
        %1281 = vmax.xlane.f32.xlu0 %v1280
        %v1282 = vpop.xlane.xlu0 %1281
        %v1283 = vsel %vm1088, %v1222, -inf
        %1284 = vmax.xlane.f32.xlu0 %v1283
        %v1285 = vpop.xlane.xlu0 %1284
        %v1286 = vsel %vm1088, %v1268, -inf
        %1287 = vmax.xlane.f32.xlu0 %v1286
        %v1288 = vpop.xlane.xlu0 %1287
        %v1289 = vmax.f32 %v1273, %v1279
        %v1290 = vmax.f32 %v1274, %v1282
        %v1291 = vmax.f32 %v1275, %v1285
        %v1292 = vmax.f32 %v1276, %v1288
        %v1293 = vsub.f32 %v1273, %v1289
        %v1294 = vsub.f32 %v1274, %v1290
        %v1295 = vsub.f32 %v1275, %v1291
        %v1296 = vsub.f32 %v1276, %v1292
        %v1297 = vmul.f32 %v1293, 1.442695
        %v1298 = vpow.pop %v1297
        %v1299 = vmul.f32 %v1294, 1.442695
        %v1300 = vpow.pop %v1299
        %v1301 = vmul.f32 %v1295, 1.442695
        %v1302 = vpow.pop %v1301
        %v1303 = vmul.f32 %v1296, 1.442695
        %v1304 = vpow.pop %v1303
        %1306 = vset.pattern.permute.xlu0 0
        %1307 = vperm.xlu0 %1306, %v1289
        %v1308 = vpop.permute.xlu0 %1307
        %1311 = vset.pattern.permute.xlu0 0
        %1312 = vperm.xlu0 %1311, %v1290
        %v1313 = vpop.permute.xlu0 %1312
        %1316 = vset.pattern.permute.xlu0 0
        %1317 = vperm.xlu0 %1316, %v1291
        %v1318 = vpop.permute.xlu0 %1317
        %1321 = vset.pattern.permute.xlu0 0
        %1322 = vperm.xlu0 %1321, %v1292
        %v1323 = vpop.permute.xlu0 %1322
        %v1325 = vsub.f32 %v1130, %v1308
        %v1326 = vsub.f32 %v1176, %v1313
        %v1327 = vsub.f32 %v1222, %v1318
        %v1328 = vsub.f32 %v1268, %v1323
        %v1329 = vmul.f32 %v1325, 1.442695
        %v1330 = vpow.pop %v1329
        %v1331 = vmul.f32 %v1326, 1.442695
        %v1332 = vpow.pop %v1331
        %v1333 = vmul.f32 %v1327, 1.442695
        %v1334 = vpow.pop %v1333
        %v1335 = vmul.f32 %v1328, 1.442695
        %v1336 = vpow.pop %v1335
        %v1337 = vld [vmem:[#allocation4] sm:$0xff]
        %v1338 = vld [vmem:[#allocation4 + $0x8] sm:$0xff]
        %v1339 = vld [vmem:[#allocation4 + $0x10] sm:$0xff]
        %v1340 = vld [vmem:[#allocation4 + $0x18] sm:$0xff]
        %v1341 = vmul.f32 %v1298, %v1337
        %v1342 = vmul.f32 %v1300, %v1338
        %v1343 = vmul.f32 %v1302, %v1339
        %v1344 = vmul.f32 %v1304, %v1340
        %v1345 = vsel %vm1088, %v1330, 0.0
        %1346 = vadd.xlane.f32.xlu0 %v1345
        %v1347 = vpop.xlane.xlu0 %1346
        %v1348 = vsel %vm1088, %v1332, 0.0
        %1349 = vadd.xlane.f32.xlu0 %v1348
        %v1350 = vpop.xlane.xlu0 %1349
        %v1351 = vsel %vm1088, %v1334, 0.0
        %1352 = vadd.xlane.f32.xlu0 %v1351
        %v1353 = vpop.xlane.xlu0 %1352
        %v1354 = vsel %vm1088, %v1336, 0.0
        %1355 = vadd.xlane.f32.xlu0 %v1354
        %v1356 = vpop.xlane.xlu0 %1355
        %v1357 = vadd.f32 %v1341, %v1347
        %v1358 = vadd.f32 %v1342, %v1350
        %v1359 = vadd.f32 %v1343, %v1353
        %v1360 = vadd.f32 %v1344, %v1356
        %vm1361 = vcmask 7168
        %1362 = vst.msk [vmem:[#allocation4] sm:$0xff] %vm1361, %v1357
        %1363 = vst.msk [vmem:[#allocation4 + $0x8] sm:$0xff] %vm1361, %v1358
        %1364 = vst.msk [vmem:[#allocation4 + $0x10] sm:$0xff] %vm1361, %v1359
        %1365 = vst.msk [vmem:[#allocation4 + $0x18] sm:$0xff] %vm1361, %v1360
        %v1366 = vpack.c.bf16 %v1330, %v1330
        %v1367 = vpack.c.bf16 %v1332, %v1332
        %v1368 = vpack.c.bf16 %v1334, %v1334
        %v1369 = vpack.c.bf16 %v1336, %v1336
        %v1370 = vld [vmem:[#allocation5] sm:$0xff]
        %v1371 = vld [vmem:[#allocation5 + $0x8] sm:$0xff]
        %v1372 = vld [vmem:[#allocation5 + $0x10] sm:$0xff]
        %v1373 = vld [vmem:[#allocation5 + $0x18] sm:$0xff]
        %1375 = vset.pattern.permute.xlu0 0
        %1376 = vperm.xlu0 %1375, %v1298
        %v1377 = vpop.permute.xlu0 %1376
        %1380 = vset.pattern.permute.xlu0 0
        %1381 = vperm.xlu0 %1380, %v1300
        %v1382 = vpop.permute.xlu0 %1381
        %1385 = vset.pattern.permute.xlu0 0
        %1386 = vperm.xlu0 %1385, %v1302
        %v1387 = vpop.permute.xlu0 %1386
        %1390 = vset.pattern.permute.xlu0 0
        %1391 = vperm.xlu0 %1390, %v1304
        %v1392 = vpop.permute.xlu0 %1391
        %v1394 = vmul.f32 %v1377, %v1370
        %v1395 = vmul.f32 %v1382, %v1371
        %v1396 = vmul.f32 %v1387, %v1372
        %v1397 = vmul.f32 %v1392, %v1373
        %v1399 = vsel %vm1088, %v1366, 0
        %vm1401 = vcmask 1043456
        %v1403 = vsel %vm1401, %v1080, 0
        %1405 = vmatprep.subr.bf16.mxu0 0
        %1406 = vmatpush1.bf16.msra.mxu0 %v1403
        %1407 = vmatprep.subr.bf16.mxu0 0
        %1408 = vmatpush1.bf16.msra.mxu0 0
        %1409 = vmatprep.subr.bf16.mxu0 0
        %1410 = vmatpush1.bf16.msra.mxu0 0
        %1411 = vmatprep.subr.bf16.mxu0 0
        %1412 = vmatpush1.bf16.msra.mxu0 0
        %1413 = vmatprep.subr.bf16.mxu0 0
        %1414 = vmatpush1.bf16.msra.mxu0 0
        %1415 = vmatprep.subr.bf16.mxu0 0
        %1416 = vmatpush1.bf16.msra.mxu0 0
        %1417 = vmatprep.subr.bf16.mxu0 0
        %1418 = vmatpush1.bf16.msra.mxu0 0
        %1419 = vmatprep.subr.bf16.mxu0 0
        %1420 = vmatpush1.bf16.msra.mxu0 0
        %1421 = vmatprep.subr.bf16.mxu0 0
        %1422 = vmatpush1.bf16.msra.mxu0 0
        %1423 = vmatprep.subr.bf16.mxu0 0
        %1424 = vmatpush1.bf16.msra.mxu0 0
        %1425 = vmatprep.subr.bf16.mxu0 0
        %1426 = vmatpush1.bf16.msra.mxu0 0
        %1427 = vmatprep.subr.bf16.mxu0 0
        %1428 = vmatpush1.bf16.msra.mxu0 0
        %1429 = vmatprep.subr.bf16.mxu0 0
        %1430 = vmatpush1.bf16.msra.mxu0 0
        %1431 = vmatprep.subr.bf16.mxu0 0
        %1432 = vmatpush1.bf16.msra.mxu0 0
        %1433 = vmatprep.subr.bf16.mxu0 0
        %1434 = vmatpush1.bf16.msra.mxu0 0
        %1435 = vmatprep.subr.bf16.mxu0 0
        %1436 = vmatpush1.bf16.msra.mxu0 0
        %1437 = vmatprep.mubr.bf16.mxu0 0
        %1438 = vmatmul.mubr.bf16.gmra.mrb[0].mxu0 %v1399
        %v1439 = vpop.f32.mrb[0].mxu0
        %v1440 = vadd.f32 0.0, %v1439
        %v1441 = vpop.f32.mrb[0].mxu0
        %v1442 = vpop.f32.mrb[0].mxu0
        %v1443 = vpop.f32.mrb[0].mxu0
        %1444 = vdwg.mxu0
        %v1446 = vsel %vm1088, %v1367, 0
        %v1449 = vsel %vm1401, %v1081, 0
        %1451 = vmatprep.subr.bf16.mxu0 0
        %1452 = vmatpush1.bf16.msra.mxu0 %v1449
        %1453 = vmatprep.subr.bf16.mxu0 0
        %1454 = vmatpush1.bf16.msra.mxu0 0
        %1455 = vmatprep.subr.bf16.mxu0 0
        %1456 = vmatpush1.bf16.msra.mxu0 0
        %1457 = vmatprep.subr.bf16.mxu0 0
        %1458 = vmatpush1.bf16.msra.mxu0 0
        %1459 = vmatprep.subr.bf16.mxu0 0
        %1460 = vmatpush1.bf16.msra.mxu0 0
        %1461 = vmatprep.subr.bf16.mxu0 0
        %1462 = vmatpush1.bf16.msra.mxu0 0
        %1463 = vmatprep.subr.bf16.mxu0 0
        %1464 = vmatpush1.bf16.msra.mxu0 0
        %1465 = vmatprep.subr.bf16.mxu0 0
        %1466 = vmatpush1.bf16.msra.mxu0 0
        %1467 = vmatprep.subr.bf16.mxu0 0
        %1468 = vmatpush1.bf16.msra.mxu0 0
        %1469 = vmatprep.subr.bf16.mxu0 0
        %1470 = vmatpush1.bf16.msra.mxu0 0
        %1471 = vmatprep.subr.bf16.mxu0 0
        %1472 = vmatpush1.bf16.msra.mxu0 0
        %1473 = vmatprep.subr.bf16.mxu0 0
        %1474 = vmatpush1.bf16.msra.mxu0 0
        %1475 = vmatprep.subr.bf16.mxu0 0
        %1476 = vmatpush1.bf16.msra.mxu0 0
        %1477 = vmatprep.subr.bf16.mxu0 0
        %1478 = vmatpush1.bf16.msra.mxu0 0
        %1479 = vmatprep.subr.bf16.mxu0 0
        %1480 = vmatpush1.bf16.msra.mxu0 0
        %1481 = vmatprep.subr.bf16.mxu0 0
        %1482 = vmatpush1.bf16.msra.mxu0 0
        %1483 = vmatprep.mubr.bf16.mxu0 0
        %1484 = vmatmul.mubr.bf16.gmra.mrb[0].mxu0 %v1446
        %v1485 = vpop.f32.mrb[0].mxu0
        %v1486 = vadd.f32 0.0, %v1485
        %v1487 = vpop.f32.mrb[0].mxu0
        %v1488 = vpop.f32.mrb[0].mxu0
        %v1489 = vpop.f32.mrb[0].mxu0
        %1490 = vdwg.mxu0
        %v1492 = vsel %vm1088, %v1368, 0
        %v1495 = vsel %vm1401, %v1082, 0
        %1497 = vmatprep.subr.bf16.mxu0 0
        %1498 = vmatpush1.bf16.msra.mxu0 %v1495
        %1499 = vmatprep.subr.bf16.mxu0 0
        %1500 = vmatpush1.bf16.msra.mxu0 0
        %1501 = vmatprep.subr.bf16.mxu0 0
        %1502 = vmatpush1.bf16.msra.mxu0 0
        %1503 = vmatprep.subr.bf16.mxu0 0
        %1504 = vmatpush1.bf16.msra.mxu0 0
        %1505 = vmatprep.subr.bf16.mxu0 0
        %1506 = vmatpush1.bf16.msra.mxu0 0
        %1507 = vmatprep.subr.bf16.mxu0 0
        %1508 = vmatpush1.bf16.msra.mxu0 0
        %1509 = vmatprep.subr.bf16.mxu0 0
        %1510 = vmatpush1.bf16.msra.mxu0 0
        %1511 = vmatprep.subr.bf16.mxu0 0
        %1512 = vmatpush1.bf16.msra.mxu0 0
        %1513 = vmatprep.subr.bf16.mxu0 0
        %1514 = vmatpush1.bf16.msra.mxu0 0
        %1515 = vmatprep.subr.bf16.mxu0 0
        %1516 = vmatpush1.bf16.msra.mxu0 0
        %1517 = vmatprep.subr.bf16.mxu0 0
        %1518 = vmatpush1.bf16.msra.mxu0 0
        %1519 = vmatprep.subr.bf16.mxu0 0
        %1520 = vmatpush1.bf16.msra.mxu0 0
        %1521 = vmatprep.subr.bf16.mxu0 0
        %1522 = vmatpush1.bf16.msra.mxu0 0
        %1523 = vmatprep.subr.bf16.mxu0 0
        %1524 = vmatpush1.bf16.msra.mxu0 0
        %1525 = vmatprep.subr.bf16.mxu0 0
        %1526 = vmatpush1.bf16.msra.mxu0 0
        %1527 = vmatprep.subr.bf16.mxu0 0
        %1528 = vmatpush1.bf16.msra.mxu0 0
        %1529 = vmatprep.mubr.bf16.mxu0 0
        %1530 = vmatmul.mubr.bf16.gmra.mrb[0].mxu0 %v1492
        %v1531 = vpop.f32.mrb[0].mxu0
        %v1532 = vadd.f32 0.0, %v1531
        %v1533 = vpop.f32.mrb[0].mxu0
        %v1534 = vpop.f32.mrb[0].mxu0
        %v1535 = vpop.f32.mrb[0].mxu0
        %1536 = vdwg.mxu0
        %v1538 = vsel %vm1088, %v1369, 0
        %v1541 = vsel %vm1401, %v1083, 0
        %1543 = vmatprep.subr.bf16.mxu0 0
        %1544 = vmatpush1.bf16.msra.mxu0 %v1541
        %1545 = vmatprep.subr.bf16.mxu0 0
        %1546 = vmatpush1.bf16.msra.mxu0 0
        %1547 = vmatprep.subr.bf16.mxu0 0
        %1548 = vmatpush1.bf16.msra.mxu0 0
        %1549 = vmatprep.subr.bf16.mxu0 0
        %1550 = vmatpush1.bf16.msra.mxu0 0
        %1551 = vmatprep.subr.bf16.mxu0 0
        %1552 = vmatpush1.bf16.msra.mxu0 0
        %1553 = vmatprep.subr.bf16.mxu0 0
        %1554 = vmatpush1.bf16.msra.mxu0 0
        %1555 = vmatprep.subr.bf16.mxu0 0
        %1556 = vmatpush1.bf16.msra.mxu0 0
        %1557 = vmatprep.subr.bf16.mxu0 0
        %1558 = vmatpush1.bf16.msra.mxu0 0
        %1559 = vmatprep.subr.bf16.mxu0 0
        %1560 = vmatpush1.bf16.msra.mxu0 0
        %1561 = vmatprep.subr.bf16.mxu0 0
        %1562 = vmatpush1.bf16.msra.mxu0 0
        %1563 = vmatprep.subr.bf16.mxu0 0
        %1564 = vmatpush1.bf16.msra.mxu0 0
        %1565 = vmatprep.subr.bf16.mxu0 0
        %1566 = vmatpush1.bf16.msra.mxu0 0
        %1567 = vmatprep.subr.bf16.mxu0 0
        %1568 = vmatpush1.bf16.msra.mxu0 0
        %1569 = vmatprep.subr.bf16.mxu0 0
        %1570 = vmatpush1.bf16.msra.mxu0 0
        %1571 = vmatprep.subr.bf16.mxu0 0
        %1572 = vmatpush1.bf16.msra.mxu0 0
        %1573 = vmatprep.subr.bf16.mxu0 0
        %1574 = vmatpush1.bf16.msra.mxu0 0
        %1575 = vmatprep.mubr.bf16.mxu0 0
        %1576 = vmatmul.mubr.bf16.gmra.mrb[0].mxu0 %v1538
        %v1577 = vpop.f32.mrb[0].mxu0
        %v1578 = vadd.f32 0.0, %v1577
        %v1579 = vpop.f32.mrb[0].mxu0
        %v1580 = vpop.f32.mrb[0].mxu0
        %v1581 = vpop.f32.mrb[0].mxu0
        %1582 = vdwg.mxu0
        %v1583 = vadd.f32 %v1394, %v1440
        %v1584 = vadd.f32 %v1395, %v1486
        %v1585 = vadd.f32 %v1396, %v1532
        %v1586 = vadd.f32 %v1397, %v1578
        %1587 = vst.msk [vmem:[#allocation5] sm:$0xff] %vm1088, %v1583
        %1588 = vst.msk [vmem:[#allocation5 + $0x8] sm:$0xff] %vm1088, %v1584
        %1589 = vst.msk [vmem:[#allocation5 + $0x10] sm:$0xff] %vm1088, %v1585
        %1590 = vst.msk [vmem:[#allocation5 + $0x18] sm:$0xff] %vm1088, %v1586
        %1591 = vst.msk [vmem:[#allocation3] sm:$0xff] %vm1361, %v1289
        %1592 = vst.msk [vmem:[#allocation3 + $0x8] sm:$0xff] %vm1361, %v1290
        %1593 = vst.msk [vmem:[#allocation3 + $0x10] sm:$0xff] %vm1361, %v1291
        %1594 = vst.msk [vmem:[#allocation3 + $0x18] sm:$0xff] %vm1361, %v1292
        // Predicated region
        $region53: #{tpu_custom_call.1} parent=47 // pred_check
          %p1595 = pneg %p363
        $region54: #{tpu_custom_call.1} parent=47 // pred_check_branch
          %1597 = sbr.rel (%p1595) target = $region56
        $region55: #{tpu_custom_call.1} parent=47 // pred_region
          %v1598 = vld [vmem:[#allocation5] sm:$0xff]
          %v1599 = vld [vmem:[#allocation5 + $0x8] sm:$0xff]
          %v1600 = vld [vmem:[#allocation5 + $0x10] sm:$0xff]
          %v1601 = vld [vmem:[#allocation5 + $0x18] sm:$0xff]
          %v1602 = vld [vmem:[#allocation4] sm:$0xff]
          %v1603 = vld [vmem:[#allocation4 + $0x8] sm:$0xff]
          %v1604 = vld [vmem:[#allocation4 + $0x10] sm:$0xff]
          %v1605 = vld [vmem:[#allocation4 + $0x18] sm:$0xff]
          %v1606 = vrcp.pop %v1602
          %v1607 = vrcp.pop %v1603
          %v1608 = vrcp.pop %v1604
          %v1609 = vrcp.pop %v1605
          %1611 = vset.pattern.permute.xlu0 0
          %1612 = vperm.xlu0 %1611, %v1606
          %v1613 = vpop.permute.xlu0 %1612
          %1616 = vset.pattern.permute.xlu0 0
          %1617 = vperm.xlu0 %1616, %v1607
          %v1618 = vpop.permute.xlu0 %1617
          %1621 = vset.pattern.permute.xlu0 0
          %1622 = vperm.xlu0 %1621, %v1608
          %v1623 = vpop.permute.xlu0 %1622
          %1626 = vset.pattern.permute.xlu0 0
          %1627 = vperm.xlu0 %1626, %v1609
          %v1628 = vpop.permute.xlu0 %1627
          %v1630 = vmul.f32 %v1598, %v1613
          %v1631 = vmul.f32 %v1599, %v1618
          %v1632 = vmul.f32 %v1600, %v1623
          %v1633 = vmul.f32 %v1601, %v1628
          %v1634 = vpack.c.bf16 %v1630, %v1630
          %v1635 = vpack.c.bf16 %v1631, %v1631
          %v1636 = vpack.c.bf16 %v1632, %v1632
          %v1637 = vpack.c.bf16 %v1633, %v1633
          %v1638 = vld [vmem:[%s6] sm:$0xf]
          %v1639 = vld [vmem:[%s6 + $0x4] sm:$0xf]
          %v1640 = vld [vmem:[%s6 + $0x8] sm:$0xf]
          %v1641 = vld [vmem:[%s6 + $0xc] sm:$0xf]
          %v1643 = vsel %vm1088, %v1634, 0
          %v1646 = vsel %vm1401, %v1638, 0
          %1648 = vmatprep.subr.bf16.mxu0 0
          %1649 = vmatpush1.bf16.msra.mxu0 %v1646
          %1650 = vmatprep.subr.bf16.mxu0 0
          %1651 = vmatpush1.bf16.msra.mxu0 0
          %1652 = vmatprep.subr.bf16.mxu0 0
          %1653 = vmatpush1.bf16.msra.mxu0 0
          %1654 = vmatprep.subr.bf16.mxu0 0
          %1655 = vmatpush1.bf16.msra.mxu0 0
          %1656 = vmatprep.subr.bf16.mxu0 0
          %1657 = vmatpush1.bf16.msra.mxu0 0
          %1658 = vmatprep.subr.bf16.mxu0 0
          %1659 = vmatpush1.bf16.msra.mxu0 0
          %1660 = vmatprep.subr.bf16.mxu0 0
          %1661 = vmatpush1.bf16.msra.mxu0 0
          %1662 = vmatprep.subr.bf16.mxu0 0
          %1663 = vmatpush1.bf16.msra.mxu0 0
          %1664 = vmatprep.subr.bf16.mxu0 0
          %1665 = vmatpush1.bf16.msra.mxu0 0
          %1666 = vmatprep.subr.bf16.mxu0 0
          %1667 = vmatpush1.bf16.msra.mxu0 0
          %1668 = vmatprep.subr.bf16.mxu0 0
          %1669 = vmatpush1.bf16.msra.mxu0 0
          %1670 = vmatprep.subr.bf16.mxu0 0
          %1671 = vmatpush1.bf16.msra.mxu0 0
          %1672 = vmatprep.subr.bf16.mxu0 0
          %1673 = vmatpush1.bf16.msra.mxu0 0
          %1674 = vmatprep.subr.bf16.mxu0 0
          %1675 = vmatpush1.bf16.msra.mxu0 0
          %1676 = vmatprep.subr.bf16.mxu0 0
          %1677 = vmatpush1.bf16.msra.mxu0 0
          %1678 = vmatprep.subr.bf16.mxu0 0
          %1679 = vmatpush1.bf16.msra.mxu0 0
          %1680 = vmatprep.mubr.bf16.mxu0 0
          %1681 = vmatmul.mubr.bf16.gmra.mrb[0].mxu0 %v1643
          %v1682 = vpop.f32.mrb[0].mxu0
          %v1683 = vadd.f32 0.0, %v1682
          %v1684 = vpop.f32.mrb[0].mxu0
          %v1685 = vpop.f32.mrb[0].mxu0
          %v1686 = vpop.f32.mrb[0].mxu0
          %1687 = vdwg.mxu0
          %v1689 = vsel %vm1088, %v1635, 0
          %v1692 = vsel %vm1401, %v1639, 0
          %1694 = vmatprep.subr.bf16.mxu0 0
          %1695 = vmatpush1.bf16.msra.mxu0 %v1692
          %1696 = vmatprep.subr.bf16.mxu0 0
          %1697 = vmatpush1.bf16.msra.mxu0 0
          %1698 = vmatprep.subr.bf16.mxu0 0
          %1699 = vmatpush1.bf16.msra.mxu0 0
          %1700 = vmatprep.subr.bf16.mxu0 0
          %1701 = vmatpush1.bf16.msra.mxu0 0
          %1702 = vmatprep.subr.bf16.mxu0 0
          %1703 = vmatpush1.bf16.msra.mxu0 0
          %1704 = vmatprep.subr.bf16.mxu0 0
          %1705 = vmatpush1.bf16.msra.mxu0 0
          %1706 = vmatprep.subr.bf16.mxu0 0
          %1707 = vmatpush1.bf16.msra.mxu0 0
          %1708 = vmatprep.subr.bf16.mxu0 0
          %1709 = vmatpush1.bf16.msra.mxu0 0
          %1710 = vmatprep.subr.bf16.mxu0 0
          %1711 = vmatpush1.bf16.msra.mxu0 0
          %1712 = vmatprep.subr.bf16.mxu0 0
          %1713 = vmatpush1.bf16.msra.mxu0 0
          %1714 = vmatprep.subr.bf16.mxu0 0
          %1715 = vmatpush1.bf16.msra.mxu0 0
          %1716 = vmatprep.subr.bf16.mxu0 0
          %1717 = vmatpush1.bf16.msra.mxu0 0
          %1718 = vmatprep.subr.bf16.mxu0 0
          %1719 = vmatpush1.bf16.msra.mxu0 0
          %1720 = vmatprep.subr.bf16.mxu0 0
          %1721 = vmatpush1.bf16.msra.mxu0 0
          %1722 = vmatprep.subr.bf16.mxu0 0
          %1723 = vmatpush1.bf16.msra.mxu0 0
          %1724 = vmatprep.subr.bf16.mxu0 0
          %1725 = vmatpush1.bf16.msra.mxu0 0
          %1726 = vmatprep.mubr.bf16.mxu0 0
          %1727 = vmatmul.mubr.bf16.gmra.mrb[0].mxu0 %v1689
          %v1728 = vpop.f32.mrb[0].mxu0
          %v1729 = vadd.f32 0.0, %v1728
          %v1730 = vpop.f32.mrb[0].mxu0
          %v1731 = vpop.f32.mrb[0].mxu0
          %v1732 = vpop.f32.mrb[0].mxu0
          %1733 = vdwg.mxu0
          %v1735 = vsel %vm1088, %v1636, 0
          %v1738 = vsel %vm1401, %v1640, 0
          %1740 = vmatprep.subr.bf16.mxu0 0
          %1741 = vmatpush1.bf16.msra.mxu0 %v1738
          %1742 = vmatprep.subr.bf16.mxu0 0
          %1743 = vmatpush1.bf16.msra.mxu0 0
          %1744 = vmatprep.subr.bf16.mxu0 0
          %1745 = vmatpush1.bf16.msra.mxu0 0
          %1746 = vmatprep.subr.bf16.mxu0 0
          %1747 = vmatpush1.bf16.msra.mxu0 0
          %1748 = vmatprep.subr.bf16.mxu0 0
          %1749 = vmatpush1.bf16.msra.mxu0 0
          %1750 = vmatprep.subr.bf16.mxu0 0
          %1751 = vmatpush1.bf16.msra.mxu0 0
          %1752 = vmatprep.subr.bf16.mxu0 0
          %1753 = vmatpush1.bf16.msra.mxu0 0
          %1754 = vmatprep.subr.bf16.mxu0 0
          %1755 = vmatpush1.bf16.msra.mxu0 0
          %1756 = vmatprep.subr.bf16.mxu0 0
          %1757 = vmatpush1.bf16.msra.mxu0 0
          %1758 = vmatprep.subr.bf16.mxu0 0
          %1759 = vmatpush1.bf16.msra.mxu0 0
          %1760 = vmatprep.subr.bf16.mxu0 0
          %1761 = vmatpush1.bf16.msra.mxu0 0
          %1762 = vmatprep.subr.bf16.mxu0 0
          %1763 = vmatpush1.bf16.msra.mxu0 0
          %1764 = vmatprep.subr.bf16.mxu0 0
          %1765 = vmatpush1.bf16.msra.mxu0 0
          %1766 = vmatprep.subr.bf16.mxu0 0
          %1767 = vmatpush1.bf16.msra.mxu0 0
          %1768 = vmatprep.subr.bf16.mxu0 0
          %1769 = vmatpush1.bf16.msra.mxu0 0
          %1770 = vmatprep.subr.bf16.mxu0 0
          %1771 = vmatpush1.bf16.msra.mxu0 0
          %1772 = vmatprep.mubr.bf16.mxu0 0
          %1773 = vmatmul.mubr.bf16.gmra.mrb[0].mxu0 %v1735
          %v1774 = vpop.f32.mrb[0].mxu0
          %v1775 = vadd.f32 0.0, %v1774
          %v1776 = vpop.f32.mrb[0].mxu0
          %v1777 = vpop.f32.mrb[0].mxu0
          %v1778 = vpop.f32.mrb[0].mxu0
          %1779 = vdwg.mxu0
          %v1781 = vsel %vm1088, %v1637, 0
          %v1784 = vsel %vm1401, %v1641, 0
          %1786 = vmatprep.subr.bf16.mxu0 0
          %1787 = vmatpush1.bf16.msra.mxu0 %v1784
          %1788 = vmatprep.subr.bf16.mxu0 0
          %1789 = vmatpush1.bf16.msra.mxu0 0
          %1790 = vmatprep.subr.bf16.mxu0 0
          %1791 = vmatpush1.bf16.msra.mxu0 0
          %1792 = vmatprep.subr.bf16.mxu0 0
          %1793 = vmatpush1.bf16.msra.mxu0 0
          %1794 = vmatprep.subr.bf16.mxu0 0
          %1795 = vmatpush1.bf16.msra.mxu0 0
          %1796 = vmatprep.subr.bf16.mxu0 0
          %1797 = vmatpush1.bf16.msra.mxu0 0
          %1798 = vmatprep.subr.bf16.mxu0 0
          %1799 = vmatpush1.bf16.msra.mxu0 0
          %1800 = vmatprep.subr.bf16.mxu0 0
          %1801 = vmatpush1.bf16.msra.mxu0 0
          %1802 = vmatprep.subr.bf16.mxu0 0
          %1803 = vmatpush1.bf16.msra.mxu0 0
          %1804 = vmatprep.subr.bf16.mxu0 0
          %1805 = vmatpush1.bf16.msra.mxu0 0
          %1806 = vmatprep.subr.bf16.mxu0 0
          %1807 = vmatpush1.bf16.msra.mxu0 0
          %1808 = vmatprep.subr.bf16.mxu0 0
          %1809 = vmatpush1.bf16.msra.mxu0 0
          %1810 = vmatprep.subr.bf16.mxu0 0
          %1811 = vmatpush1.bf16.msra.mxu0 0
          %1812 = vmatprep.subr.bf16.mxu0 0
          %1813 = vmatpush1.bf16.msra.mxu0 0
          %1814 = vmatprep.subr.bf16.mxu0 0
          %1815 = vmatpush1.bf16.msra.mxu0 0
          %1816 = vmatprep.subr.bf16.mxu0 0
          %1817 = vmatpush1.bf16.msra.mxu0 0
          %1818 = vmatprep.mubr.bf16.mxu0 0
          %1819 = vmatmul.mubr.bf16.gmra.mrb[0].mxu0 %v1781
          %v1820 = vpop.f32.mrb[0].mxu0
          %v1821 = vadd.f32 0.0, %v1820
          %v1822 = vpop.f32.mrb[0].mxu0
          %v1823 = vpop.f32.mrb[0].mxu0
          %v1824 = vpop.f32.mrb[0].mxu0
          %1825 = vdwg.mxu0
          %v1826 = vsel %vm649, %v1683, 0.0
          %v1827 = vsel %vm649, %v1729, 0.0
          %v1828 = vadd.f32 %v1826, %v1827
          %v1829 = vsel %vm649, %v1775, 0.0
          %v1830 = vadd.f32 %v1828, %v1829
          %v1831 = vsel %vm649, %v1821, 0.0
          %v1832 = vadd.f32 %v1830, %v1831
          %1833 = vst.msk [vmem:[%s340] sm:$0xff] %vm649, %v1832
        $region56: #{tpu_custom_call.1} parent=47 // pred_fallthru
          _
        %s1834 = sand.u32 %s218, 1
        %s1835 = scalar_lea.sflag [#allocation7], %s1834
        %s1836 = sand.u32 %s218, 1
        %s1837 = smul.addr %s1836, 8
        %s1838 = scalar_lea.vmem [#allocation6], %s1837
        // Predicated region
        $region57: #{tpu_custom_call.1} parent=47 // pred_check
          %p1839 = pneg %p228
        $region58: #{tpu_custom_call.1} parent=47 // pred_check_branch
          %1841 = sbr.rel (%p1839) target = $region60
        $region59: #{tpu_custom_call.1} parent=47 // pred_region
          %s1843 = ssub.s32 128, 128
          %1844 = vsyncadd %s1835, %s1843
          %s1845 = sadd.s32 %s27, %s26
          %s1846 = smul.addr %s1845, 128
          %s1847 = scalar_lea.hbm %s7, %s1846
          %s1849 = sshll.u32 %s1838, 4
          %s1850 = int_to_ptr.vmem [resolvable:$true] %s1849
          %1852 = dma.vmem_to_hbm [thread:$0]  %s1850, 128, %s1847, %s1835
        $region60: #{tpu_custom_call.1} parent=47 // pred_fallthru
          _
      $region48: #{tpu_custom_call.1} parent=5 // pred_fallthru
        _
      %p1853 = scmp.le.s32.totalorder 2, %s16
      // Predicated region
      $region61: #{tpu_custom_call.1} parent=5 // pred_check
        %p1854 = pneg %p1853
      $region62: #{tpu_custom_call.1} parent=5 // pred_check_branch
        %1856 = sbr.rel (%p1854) target = $region64
      $region63: #{tpu_custom_call.1} parent=5 // pred_region
        %s1857 = ssub.s32 %s16, 2
        // Predicated region
        $region65: #{tpu_custom_call.1} parent=63 // pred_check
          %p1858 = pneg %p234
        $region66: #{tpu_custom_call.1} parent=63 // pred_check_branch
          %1860 = sbr.rel (%p1858) target = $region68
        $region67: #{tpu_custom_call.1} parent=63 // pred_region
          %s1861 = sand.u32 %s219, 1
          %s1862 = scalar_lea.sflag [#allocation7], %s1861
          %s1863 = sand.u32 %s219, 1
          %s1864 = smul.addr %s1863, 8
          %s1865 = scalar_lea.vmem [#allocation6], %s1864
          %1866 = dma.done %s1862, 128
        $region68: #{tpu_custom_call.1} parent=63 // pred_fallthru
          _
      $region64: #{tpu_custom_call.1} parent=5 // pred_fallthru
        _
    $region6: #{tpu_custom_call.1} parent=1 // loop_footer
      %s20 = sadd.s32 1, %s16
    $region7: #{tpu_custom_call.1} parent=1 // loop_footer_branch
      %15 = sbr.rel target = $region3
    $region8: #{tpu_custom_call.1} parent=1 // loop_exit
      _
    %1867 = vsyncpa [#allocation7], 1
    %s1868 = scalar_lea.sflag [#allocation7], 1
    %1869 = vsyncpa %s1868, 1

</llo_original>
